<compile_context>
chip_gen: v7x
topology: tpu7x:2x2x1
jax: 0.10.0
libtpu: 0.0.40
codegen_flags: <defaults>
</compile_context>

<pallas_src>
import functools
import math

import jax
import jax.numpy as jnp
from jax import lax
from jax.experimental import pallas as pl
from jax.experimental.pallas import tpu as pltpu


def _round_up(n, m):
    return ((n + m - 1) // m) * m


def _cdiv(a, b):
    return (a + b - 1) // b


_INV_SQRT2 = 1.0 / math.sqrt(2.0)
_MIB = 1024 * 1024


def _leaky_relu(t):
    # slope 0.2 in (0, 1)  =>  max(t, 0.2*t) == LeakyReLU(0.2)(t); one VALU op.
    return jnp.maximum(t, jnp.float32(0.2) * t)


# --------------------------- resident-weight kernel ---------------------------

def resnet_fc_resident_kernel(x_ref, wmap_ref, bmap_ref, wblk_ref, bblk_ref,
                              out_ref, *, num_res_blocks, compute_dtype):
    """grid=(batch_tiles,).  All parameters are VMEM-resident (constant index
    maps, single-buffered); x/out batch tiles are pipelined HBM<->VMEM."""
    # x_ref:    [TILE_B, D_pad]            (compute_dtype)
    # wmap_ref: [D_pad, H_pad]             (compute_dtype)
    # bmap_ref: [1, H_pad]                 (f32)
    # wblk_ref: [3*nb, H_pad, H_pad]       (compute_dtype)
    # bblk_ref: [3*nb, 1, H_pad]           (f32)
    h = jnp.dot(x_ref[...], wmap_ref[...],
                preferred_element_type=jnp.float32) + bmap_ref[...]

    def res_block(b, h):
        t = h
        for i in range(3):                                   # static inner unroll
            idx = b * 3 + i
            t = jnp.dot(t.astype(compute_dtype), wblk_ref[idx],
                        preferred_element_type=jnp.float32) + bblk_ref[idx]
            t = _leaky_relu(t)
        return (h + t) * jnp.float32(_INV_SQRT2)

    if num_res_blocks <= 8:
        for b in range(num_res_blocks):                      # full static unroll
            h = res_block(b, h)
    else:
        h = lax.fori_loop(0, num_res_blocks, res_block, h)

    out_ref[...] = h.astype(out_ref.dtype)


# --------------------------- weight-streaming kernel --------------------------

def resnet_fc_stream_kernel(x_ref, wmap_ref, bmap_ref, wblk_ref, bblk_ref,
                            out_ref, h_acc, *, compute_dtype):
    """grid=(batch_tiles, num_res_blocks).  wblk_ref/bblk_ref hold only the
    current res block's 3 layers (streamed, double-buffered by the pipeline);
    h is carried across the 'arbitrary' block axis in an f32 VMEM scratch."""
    r = pl.program_id(1)

    @pl.when(r == 0)
    def _():
        h_acc[...] = jnp.dot(x_ref[...], wmap_ref[...],
                             preferred_element_type=jnp.float32) + bmap_ref[...]

    h = h_acc[...]
    t = h
    for i in range(3):
        t = jnp.dot(t.astype(compute_dtype), wblk_ref[i],
                    preferred_element_type=jnp.float32) + bblk_ref[i]
        t = _leaky_relu(t)
    h = (h + t) * jnp.float32(_INV_SQRT2)
    h_acc[...] = h

    @pl.when(r == pl.num_programs(1) - 1)
    def _():
        out_ref[...] = h.astype(out_ref.dtype)


# ------------------------------- host wrapper ---------------------------------

def resnet_fc_forward(x, w_map, b_map, w_blocks, b_blocks, *,
                      compute_dtype=jnp.bfloat16, tile_b=4096,
                      force_stream=False):
    """x: [B, D]; w_map: [D, H]; b_map: [1, H];
       w_blocks: [3*num_blocks, H, H]; b_blocks: [3*num_blocks, 1, H]."""
    batch, data_dim = x.shape
    hidden = w_map.shape[1]
    n_layers = w_blocks.shape[0]
    num_res_blocks = n_layers // 3
    assert n_layers == num_res_blocks * 3 and num_res_blocks >= 1

    out_dtype = x.dtype
    csize = jnp.dtype(compute_dtype).itemsize
    osize = jnp.dtype(out_dtype).itemsize

    # Generation-aware VMEM budget (v5e/v6e: 128 MiB, v7x: 64 MiB per TC).
    try:
        vmem_cap = int(pltpu.get_tpu_info().vmem_capacity_bytes)
    except Exception:
        vmem_cap = 64 * _MIB
    budget = int(0.85 * vmem_cap)        # headroom for Mosaic internal scratch

    # Pad to TPU-friendly shapes (zero padding is exact; sliced off at the end).
    h_pad = _round_up(hidden, 128)       # lane dim / MXU contraction
    d_pad = _round_up(max(data_dim, 1), 8)

    # Parameter footprints (resident params are single-buffered: pl.Buffered(1)).
    map_bytes = d_pad * h_pad * csize + h_pad * 4
    blk_bytes = n_layers * h_pad * h_pad * csize + n_layers * h_pad * 4
    stream = bool(force_stream) or blk_bytes > min(28 * _MIB, budget // 2)
    resident_bytes = map_bytes + (
        2 * (3 * h_pad * h_pad * csize + 3 * h_pad * 4) if stream else blk_bytes)

    # ---- batch-tile selection ------------------------------------------------
    tb = min(tile_b, _round_up(batch, 8))
    tb = _round_up(tb, 256) if tb >= 256 else _round_up(tb, 8)   # MXU M dim
    # v7x: make sure >= 2 batch tiles exist so ("parallel", ...) uses both TCs.
    if batch >= 512 and _round_up(batch, tb) == tb:
        tb = _round_up(_cdiv(batch, 2), 256)
    # Cap tb so double-buffered activation tiles + f32 temps + resident params
    # stay inside the VMEM budget.
    per_row = 2 * d_pad * csize + 2 * h_pad * osize + 20 * h_pad
    avail = max(budget - resident_bytes, 8 * per_row)
    tb_cap = max(8, (avail // per_row) // 8 * 8)
    tb = max(8, min(tb, tb_cap))
    b_pad = _round_up(batch, tb)
    num_tiles = b_pad // tb

    # ---- pad + cast (weights/x in compute_dtype, biases stay f32) -------------
    xp = jnp.pad(x, ((0, b_pad - batch), (0, d_pad - data_dim))).astype(compute_dtype)
    wmap_p = jnp.pad(w_map, ((0, d_pad - data_dim), (0, h_pad - hidden))).astype(compute_dtype)
    bmap_p = jnp.pad(b_map, ((0, 0), (0, h_pad - hidden))).astype(jnp.float32)
    wblk_p = jnp.pad(w_blocks, ((0, 0), (0, h_pad - hidden), (0, h_pad - hidden))).astype(compute_dtype)
    bblk_p = jnp.pad(b_blocks, ((0, 0), (0, 0), (0, h_pad - hidden))).astype(jnp.float32)

    # Advisory cost estimate for XLA's scheduler.
    flops = 2 * b_pad * (d_pad * h_pad + n_layers * h_pad * h_pad)
    bytes_accessed = (xp.nbytes + b_pad * h_pad * osize + wmap_p.nbytes
                      + bmap_p.nbytes + wblk_p.nbytes + bblk_p.nbytes)
    cost = pl.CostEstimate(flops=flops, transcendentals=0,
                           bytes_accessed=bytes_accessed)

    def _run(use_buffered_params):
        pmode = {"pipeline_mode": pl.Buffered(1)} if use_buffered_params else {}
        wmult = 1 if use_buffered_params else 2
        act_bytes = (2 * tb * d_pad * csize + 2 * tb * h_pad * osize
                     + 4 * tb * h_pad * 4 + (tb * h_pad * 4 if stream else 0))
        needed = wmult * resident_bytes + act_bytes
        vmem_limit = (min(int(needed * 1.25), budget)
                      if needed > 16 * _MIB else None)

        if not stream:
            grid = (num_tiles,)
            kernel = functools.partial(resnet_fc_resident_kernel,
                                       num_res_blocks=num_res_blocks,
                                       compute_dtype=compute_dtype)
            in_specs = [
                pl.BlockSpec((tb, d_pad), lambda i: (i, 0)),                         # x tile
                pl.BlockSpec((d_pad, h_pad), lambda i: (0, 0), **pmode),             # w_map
                pl.BlockSpec((1, h_pad), lambda i: (0, 0), **pmode),                 # b_map
                pl.BlockSpec((n_layers, h_pad, h_pad), lambda i: (0, 0, 0), **pmode),  # w_blocks
                pl.BlockSpec((n_layers, 1, h_pad), lambda i: (0, 0, 0), **pmode),    # b_blocks
            ]
            out_specs = pl.BlockSpec((tb, h_pad), lambda i: (i, 0))
            scratch_shapes = []
            dim_sem = ("parallel",)
        else:
            grid = (num_tiles, num_res_blocks)
            kernel = functools.partial(resnet_fc_stream_kernel,
                                       compute_dtype=compute_dtype)
            in_specs = [
                pl.BlockSpec((tb, d_pad), lambda i, r: (i, 0)),                      # x tile
                pl.BlockSpec((d_pad, h_pad), lambda i, r: (0, 0), **pmode),          # w_map
                pl.BlockSpec((1, h_pad), lambda i, r: (0, 0), **pmode),              # b_map
                # streamed + double-buffered: one res block (3 layers) per step
                pl.BlockSpec((3, h_pad, h_pad), lambda i, r: (r, 0, 0)),
                pl.BlockSpec((3, 1, h_pad), lambda i, r: (r, 0, 0)),
            ]
            out_specs = pl.BlockSpec((tb, h_pad), lambda i, r: (i, 0))
            scratch_shapes = [pltpu.VMEM((tb, h_pad), jnp.float32)]
            dim_sem = ("parallel", "arbitrary")

        return pl.pallas_call(
            kernel,
            out_shape=jax.ShapeDtypeStruct((b_pad, h_pad), out_dtype),
            grid=grid,
            in_specs=in_specs,
            out_specs=out_specs,
            scratch_shapes=scratch_shapes,
            compiler_params=pltpu.CompilerParams(
                dimension_semantics=dim_sem,
                vmem_limit_bytes=vmem_limit),
            cost_estimate=cost,
        )(xp, wmap_p, bmap_p, wblk_p, bblk_p)

    try:
        out_padded = _run(True)
    except Exception:
        # Fallback for jax versions without BlockSpec(pipeline_mode=pl.Buffered(1)).
        out_padded = _run(False)

    return out_padded[:batch, :hidden]


# --------------------------------- test harness -------------------------------

def _init_linear(key, fan_in, fan_out):
    """Mimics PyTorch nn.Linear default init (uniform +-1/sqrt(fan_in)).
       Returns W with shape [in, out] and b with shape [1, out]."""
    kw, kb = jax.random.split(key)
    bound = 1.0 / math.sqrt(fan_in)
    w = jax.random.uniform(kw, (fan_in, fan_out), jnp.float32, -bound, bound)
    b = jax.random.uniform(kb, (1, fan_out), jnp.float32, -bound, bound)
    return w, b


def _reference(x, w_map, b_map, w_blocks, b_blocks):
    h = x @ w_map + b_map
    num_blocks = w_blocks.shape[0] // 3
    for b in range(num_blocks):
        t = h
        for i in range(3):
            idx = b * 3 + i
            t = t @ w_blocks[idx] + b_blocks[idx]
            t = jnp.where(t > 0, t, 0.2 * t)
        h = (h + t) / jnp.sqrt(jnp.float32(2.0))
    return h


if __name__ == "__main__":
    batch = 8
    data_dim = 4
    hidden_dim = 32
    num_res_blocks = 2

    key = jax.random.PRNGKey(0)
    k_x, k_map, *k_blk = jax.random.split(key, 2 + num_res_blocks * 3)

    x = jax.random.normal(k_x, (batch, data_dim), jnp.float32)
    w_map, b_map = _init_linear(k_map, data_dim, hidden_dim)

    w_list, b_list = [], []
    for kb in k_blk:
        w, b = _init_linear(kb, hidden_dim, hidden_dim)
        w_list.append(w)
        b_list.append(b)
    w_blocks = jnp.stack(w_list)                      # [num_blocks*3, H, H]
    b_blocks = jnp.stack(b_list)                      # [num_blocks*3, 1, H]

    ref = _reference(x, w_map, b_map, w_blocks, b_blocks)

    # 1) f32 compute, resident-weight path: strict check.
    out_f32 = jax.block_until_ready(
        resnet_fc_forward(x, w_map, b_map, w_blocks, b_blocks,
                          compute_dtype=jnp.float32))
    assert out_f32.shape == (batch, hidden_dim)
    assert jnp.allclose(out_f32, ref, atol=1e-5, rtol=1e-5), \
        float(jnp.max(jnp.abs(out_f32 - ref)))

    # 2) f32 compute, forced weight-streaming path (big-config / v7x fallback).
    out_stream = jax.block_until_ready(
        resnet_fc_forward(x, w_map, b_map, w_blocks, b_blocks,
                          compute_dtype=jnp.float32, force_stream=True))
    assert jnp.allclose(out_stream, ref, atol=1e-5, rtol=1e-5), \
        float(jnp.max(jnp.abs(out_stream - ref)))

    # 3) default bf16 matmul operands (MXU-native on v5e/v6e/v7x): loose check.
    out_bf16 = jax.block_until_ready(
        resnet_fc_forward(x, w_map, b_map, w_blocks, b_blocks))
    assert out_bf16.shape == (batch, hidden_dim)
    assert jnp.allclose(out_bf16, ref, atol=1e-1, rtol=5e-2), \
        float(jnp.max(jnp.abs(out_bf16 - ref)))

    print("KERNEL_OK")
</pallas_src>

<mosaic_0001>
module attributes {stable_mosaic.version = 11 : i64} {
  func.func @resnet_fc_resident_kernel(%arg0: i32, %arg1: memref<8x8xf32, #tpu.memory_space<vmem>>, %arg2: memref<8x128xf32, #tpu.memory_space<vmem>>, %arg3: memref<1x128xf32, #tpu.memory_space<vmem>>, %arg4: memref<6x128x128xf32, #tpu.memory_space<vmem>>, %arg5: memref<6x1x128xf32, #tpu.memory_space<vmem>>, %arg6: memref<8x128xf32, #tpu.memory_space<vmem>>) attributes {dimension_semantics = [#tpu.dimension_semantics<parallel>], iteration_bounds = array<i64: 1>, scalar_prefetch = 0 : i64, scratch_operands = 0 : i64, tpu.core_type = #tpu.core_type<tc>, window_params = [{transform_indices = @transform_0, window_bounds = array<i64: 8, 8>}, {pipeline_mode = #tpu.pipeline_mode<synchronous>, transform_indices = @transform_1, window_bounds = array<i64: 8, 128>}, {pipeline_mode = #tpu.pipeline_mode<synchronous>, transform_indices = @transform_2, window_bounds = array<i64: 1, 128>}, {pipeline_mode = #tpu.pipeline_mode<synchronous>, transform_indices = @transform_3, window_bounds = array<i64: 6, 128, 128>}, {pipeline_mode = #tpu.pipeline_mode<synchronous>, transform_indices = @transform_4, window_bounds = array<i64: 6, 1, 128>}, {transform_indices = @transform_5, window_bounds = array<i64: 8, 128>}]} {
    %c0 = arith.constant 0 : index
    %c0_0 = arith.constant 0 : index
    %0 = vector.load %arg1[%c0, %c0_0] : memref<8x8xf32, #tpu.memory_space<vmem>>, vector<8x8xf32>
    %c0_1 = arith.constant 0 : index
    %c0_2 = arith.constant 0 : index
    %1 = vector.load %arg2[%c0_1, %c0_2] : memref<8x128xf32, #tpu.memory_space<vmem>>, vector<8x128xf32>
    %cst = arith.constant dense<0.000000e+00> : vector<8x128xf32>
    %2 = tpu.matmul %0, %1, %cst {dimension_numbers = #tpu.dot_dimension_numbers<[1], [0], [0], [1], [0, 0, 1, 1], [], []>} : vector<8x8xf32>, vector<8x128xf32>, vector<8x128xf32> -> vector<8x128xf32>
    %c0_3 = arith.constant 0 : index
    %c0_4 = arith.constant 0 : index
    %3 = vector.load %arg3[%c0_3, %c0_4] : memref<1x128xf32, #tpu.memory_space<vmem>>, vector<1x128xf32>
    %4 = vector.broadcast %3 : vector<1x128xf32> to vector<8x128xf32>
    %5 = arith.addf %2, %4 : vector<8x128xf32>
    %c0_5 = arith.constant 0 : index
    %c0_6 = arith.constant 0 : index
    %c0_7 = arith.constant 0 : index
    %6 = vector.load %arg4[%c0_5, %c0_6, %c0_7] : memref<6x128x128xf32, #tpu.memory_space<vmem>>, vector<1x128x128xf32>
    %7 = vector.shape_cast %6 : vector<1x128x128xf32> to vector<128x128xf32>
    %cst_8 = arith.constant dense<0.000000e+00> : vector<8x128xf32>
    %8 = tpu.matmul %5, %7, %cst_8 {dimension_numbers = #tpu.dot_dimension_numbers<[1], [0], [0], [1], [0, 0, 1, 1], [], []>} : vector<8x128xf32>, vector<128x128xf32>, vector<8x128xf32> -> vector<8x128xf32>
    %c0_9 = arith.constant 0 : index
    %c0_10 = arith.constant 0 : index
    %c0_11 = arith.constant 0 : index
    %9 = vector.load %arg5[%c0_9, %c0_10, %c0_11] : memref<6x1x128xf32, #tpu.memory_space<vmem>>, vector<1x1x128xf32>
    %10 = vector.shape_cast %9 : vector<1x1x128xf32> to vector<1x128xf32>
    %11 = vector.broadcast %10 : vector<1x128xf32> to vector<8x128xf32>
    %12 = arith.addf %8, %11 : vector<8x128xf32>
    %cst_12 = arith.constant 2.000000e-01 : f32
    %13 = vector.broadcast %cst_12 : f32 to vector<8x128xf32>
    %14 = arith.mulf %13, %12 : vector<8x128xf32>
    %15 = arith.maximumf %12, %14 : vector<8x128xf32>
    %c1 = arith.constant 1 : index
    %c0_13 = arith.constant 0 : index
    %c0_14 = arith.constant 0 : index
    %16 = vector.load %arg4[%c1, %c0_13, %c0_14] : memref<6x128x128xf32, #tpu.memory_space<vmem>>, vector<1x128x128xf32>
    %17 = vector.shape_cast %16 : vector<1x128x128xf32> to vector<128x128xf32>
    %cst_15 = arith.constant dense<0.000000e+00> : vector<8x128xf32>
    %18 = tpu.matmul %15, %17, %cst_15 {dimension_numbers = #tpu.dot_dimension_numbers<[1], [0], [0], [1], [0, 0, 1, 1], [], []>} : vector<8x128xf32>, vector<128x128xf32>, vector<8x128xf32> -> vector<8x128xf32>
    %c1_16 = arith.constant 1 : index
    %c0_17 = arith.constant 0 : index
    %c0_18 = arith.constant 0 : index
    %19 = vector.load %arg5[%c1_16, %c0_17, %c0_18] : memref<6x1x128xf32, #tpu.memory_space<vmem>>, vector<1x1x128xf32>
    %20 = vector.shape_cast %19 : vector<1x1x128xf32> to vector<1x128xf32>
    %21 = vector.broadcast %20 : vector<1x128xf32> to vector<8x128xf32>
    %22 = arith.addf %18, %21 : vector<8x128xf32>
    %cst_19 = arith.constant 2.000000e-01 : f32
    %23 = vector.broadcast %cst_19 : f32 to vector<8x128xf32>
    %24 = arith.mulf %23, %22 : vector<8x128xf32>
    %25 = arith.maximumf %22, %24 : vector<8x128xf32>
    %c2 = arith.constant 2 : index
    %c0_20 = arith.constant 0 : index
    %c0_21 = arith.constant 0 : index
    %26 = vector.load %arg4[%c2, %c0_20, %c0_21] : memref<6x128x128xf32, #tpu.memory_space<vmem>>, vector<1x128x128xf32>
    %27 = vector.shape_cast %26 : vector<1x128x128xf32> to vector<128x128xf32>
    %cst_22 = arith.constant dense<0.000000e+00> : vector<8x128xf32>
    %28 = tpu.matmul %25, %27, %cst_22 {dimension_numbers = #tpu.dot_dimension_numbers<[1], [0], [0], [1], [0, 0, 1, 1], [], []>} : vector<8x128xf32>, vector<128x128xf32>, vector<8x128xf32> -> vector<8x128xf32>
    %c2_23 = arith.constant 2 : index
    %c0_24 = arith.constant 0 : index
    %c0_25 = arith.constant 0 : index
    %29 = vector.load %arg5[%c2_23, %c0_24, %c0_25] : memref<6x1x128xf32, #tpu.memory_space<vmem>>, vector<1x1x128xf32>
    %30 = vector.shape_cast %29 : vector<1x1x128xf32> to vector<1x128xf32>
    %31 = vector.broadcast %30 : vector<1x128xf32> to vector<8x128xf32>
    %32 = arith.addf %28, %31 : vector<8x128xf32>
    %cst_26 = arith.constant 2.000000e-01 : f32
    %33 = vector.broadcast %cst_26 : f32 to vector<8x128xf32>
    %34 = arith.mulf %33, %32 : vector<8x128xf32>
    %35 = arith.maximumf %32, %34 : vector<8x128xf32>
    %36 = arith.addf %5, %35 : vector<8x128xf32>
    %cst_27 = arith.constant 0.707106769 : f32
    %37 = vector.broadcast %cst_27 : f32 to vector<8x128xf32>
    %38 = arith.mulf %36, %37 : vector<8x128xf32>
    %c3 = arith.constant 3 : index
    %c0_28 = arith.constant 0 : index
    %c0_29 = arith.constant 0 : index
    %39 = vector.load %arg4[%c3, %c0_28, %c0_29] : memref<6x128x128xf32, #tpu.memory_space<vmem>>, vector<1x128x128xf32>
    %40 = vector.shape_cast %39 : vector<1x128x128xf32> to vector<128x128xf32>
    %cst_30 = arith.constant dense<0.000000e+00> : vector<8x128xf32>
    %41 = tpu.matmul %38, %40, %cst_30 {dimension_numbers = #tpu.dot_dimension_numbers<[1], [0], [0], [1], [0, 0, 1, 1], [], []>} : vector<8x128xf32>, vector<128x128xf32>, vector<8x128xf32> -> vector<8x128xf32>
    %c3_31 = arith.constant 3 : index
    %c0_32 = arith.constant 0 : index
    %c0_33 = arith.constant 0 : index
    %42 = vector.load %arg5[%c3_31, %c0_32, %c0_33] : memref<6x1x128xf32, #tpu.memory_space<vmem>>, vector<1x1x128xf32>
    %43 = vector.shape_cast %42 : vector<1x1x128xf32> to vector<1x128xf32>
    %44 = vector.broadcast %43 : vector<1x128xf32> to vector<8x128xf32>
    %45 = arith.addf %41, %44 : vector<8x128xf32>
    %cst_34 = arith.constant 2.000000e-01 : f32
    %46 = vector.broadcast %cst_34 : f32 to vector<8x128xf32>
    %47 = arith.mulf %46, %45 : vector<8x128xf32>
    %48 = arith.maximumf %45, %47 : vector<8x128xf32>
    %c4 = arith.constant 4 : index
    %c0_35 = arith.constant 0 : index
    %c0_36 = arith.constant 0 : index
    %49 = vector.load %arg4[%c4, %c0_35, %c0_36] : memref<6x128x128xf32, #tpu.memory_space<vmem>>, vector<1x128x128xf32>
    %50 = vector.shape_cast %49 : vector<1x128x128xf32> to vector<128x128xf32>
    %cst_37 = arith.constant dense<0.000000e+00> : vector<8x128xf32>
    %51 = tpu.matmul %48, %50, %cst_37 {dimension_numbers = #tpu.dot_dimension_numbers<[1], [0], [0], [1], [0, 0, 1, 1], [], []>} : vector<8x128xf32>, vector<128x128xf32>, vector<8x128xf32> -> vector<8x128xf32>
    %c4_38 = arith.constant 4 : index
    %c0_39 = arith.constant 0 : index
    %c0_40 = arith.constant 0 : index
    %52 = vector.load %arg5[%c4_38, %c0_39, %c0_40] : memref<6x1x128xf32, #tpu.memory_space<vmem>>, vector<1x1x128xf32>
    %53 = vector.shape_cast %52 : vector<1x1x128xf32> to vector<1x128xf32>
    %54 = vector.broadcast %53 : vector<1x128xf32> to vector<8x128xf32>
    %55 = arith.addf %51, %54 : vector<8x128xf32>
    %cst_41 = arith.constant 2.000000e-01 : f32
    %56 = vector.broadcast %cst_41 : f32 to vector<8x128xf32>
    %57 = arith.mulf %56, %55 : vector<8x128xf32>
    %58 = arith.maximumf %55, %57 : vector<8x128xf32>
    %c5 = arith.constant 5 : index
    %c0_42 = arith.constant 0 : index
    %c0_43 = arith.constant 0 : index
    %59 = vector.load %arg4[%c5, %c0_42, %c0_43] : memref<6x128x128xf32, #tpu.memory_space<vmem>>, vector<1x128x128xf32>
    %60 = vector.shape_cast %59 : vector<1x128x128xf32> to vector<128x128xf32>
    %cst_44 = arith.constant dense<0.000000e+00> : vector<8x128xf32>
    %61 = tpu.matmul %58, %60, %cst_44 {dimension_numbers = #tpu.dot_dimension_numbers<[1], [0], [0], [1], [0, 0, 1, 1], [], []>} : vector<8x128xf32>, vector<128x128xf32>, vector<8x128xf32> -> vector<8x128xf32>
    %c5_45 = arith.constant 5 : index
    %c0_46 = arith.constant 0 : index
    %c0_47 = arith.constant 0 : index
    %62 = vector.load %arg5[%c5_45, %c0_46, %c0_47] : memref<6x1x128xf32, #tpu.memory_space<vmem>>, vector<1x1x128xf32>
    %63 = vector.shape_cast %62 : vector<1x1x128xf32> to vector<1x128xf32>
    %64 = vector.broadcast %63 : vector<1x128xf32> to vector<8x128xf32>
    %65 = arith.addf %61, %64 : vector<8x128xf32>
    %cst_48 = arith.constant 2.000000e-01 : f32
    %66 = vector.broadcast %cst_48 : f32 to vector<8x128xf32>
    %67 = arith.mulf %66, %65 : vector<8x128xf32>
    %68 = arith.maximumf %65, %67 : vector<8x128xf32>
    %69 = arith.addf %38, %68 : vector<8x128xf32>
    %cst_49 = arith.constant 0.707106769 : f32
    %70 = vector.broadcast %cst_49 : f32 to vector<8x128xf32>
    %71 = arith.mulf %69, %70 : vector<8x128xf32>
    %c0_50 = arith.constant 0 : index
    %c0_51 = arith.constant 0 : index
    %72 = vector.load %arg6[%c0_50, %c0_51] : memref<8x128xf32, #tpu.memory_space<vmem>>, vector<8x128xf32>
    tpu.vector_store %arg6[%c0_50, %c0_51], %71 {strides = array<i32>} : memref<8x128xf32, #tpu.memory_space<vmem>>, vector<8x128xf32>,
    return
  }
  func.func @transform_0(%arg0: i32) -> (i32, i32) {
    %c0_i32 = arith.constant 0 : i32
    %c0_i32_0 = arith.constant 0 : i32
    return %arg0, %c0_i32 : i32, i32
  }
  func.func @transform_1(%arg0: i32) -> (i32, i32) {
    %c0_i32 = arith.constant 0 : i32
    %c0_i32_0 = arith.constant 0 : i32
    %c0_i32_1 = arith.constant 0 : i32
    return %c0_i32, %c0_i32_0 : i32, i32
  }
  func.func @transform_2(%arg0: i32) -> (i32, i32) {
    %c0_i32 = arith.constant 0 : i32
    %c0_i32_0 = arith.constant 0 : i32
    %c0_i32_1 = arith.constant 0 : i32
    return %c0_i32, %c0_i32_0 : i32, i32
  }
  func.func @transform_3(%arg0: i32) -> (i32, i32, i32) {
    %c0_i32 = arith.constant 0 : i32
    %c0_i32_0 = arith.constant 0 : i32
    %c0_i32_1 = arith.constant 0 : i32
    %c0_i32_2 = arith.constant 0 : i32
    return %c0_i32, %c0_i32_0, %c0_i32_1 : i32, i32, i32
  }
  func.func @transform_4(%arg0: i32) -> (i32, i32, i32) {
    %c0_i32 = arith.constant 0 : i32
    %c0_i32_0 = arith.constant 0 : i32
    %c0_i32_1 = arith.constant 0 : i32
    %c0_i32_2 = arith.constant 0 : i32
    return %c0_i32, %c0_i32_0, %c0_i32_1 : i32, i32, i32
  }
  func.func @transform_5(%arg0: i32) -> (i32, i32) {
    %c0_i32 = arith.constant 0 : i32
    %c0_i32_0 = arith.constant 0 : i32
    return %arg0, %c0_i32 : i32, i32
  }
}

module attributes {stable_mosaic.version = 11 : i64} {
  func.func @resnet_fc_resident_kernel(%arg0: i32, %arg1: memref<8x8xf32, #tpu.memory_space<vmem>>, %arg2: memref<8x128xf32, #tpu.memory_space<vmem>>, %arg3: memref<1x128xf32, #tpu.memory_space<vmem>>, %arg4: memref<6x128x128xf32, #tpu.memory_space<vmem>>, %arg5: memref<6x1x128xf32, #tpu.memory_space<vmem>>, %arg6: memref<8x128xf32, #tpu.memory_space<vmem>>) attributes {dimension_semantics = [#tpu.dimension_semantics<parallel>], iteration_bounds = array<i64: 1>, scalar_prefetch = 0 : i64, scratch_operands = 0 : i64, tpu.core_type = #tpu.core_type<tc>, window_params = [{transform_indices = @transform_0, window_bounds = array<i64: 8, 8>}, {pipeline_mode = #tpu.pipeline_mode<synchronous>, transform_indices = @transform_1, window_bounds = array<i64: 8, 128>}, {pipeline_mode = #tpu.pipeline_mode<synchronous>, transform_indices = @transform_2, window_bounds = array<i64: 1, 128>}, {pipeline_mode = #tpu.pipeline_mode<synchronous>, transform_indices = @transform_3, window_bounds = array<i64: 6, 128, 128>}, {pipeline_mode = #tpu.pipeline_mode<synchronous>, transform_indices = @transform_4, window_bounds = array<i64: 6, 1, 128>}, {transform_indices = @transform_5, window_bounds = array<i64: 8, 128>}]} {
    %c0 = arith.constant 0 : index
    %c0_0 = arith.constant 0 : index
    %0 = vector.load %arg1[%c0, %c0_0] : memref<8x8xf32, #tpu.memory_space<vmem>>, vector<8x8xf32>
    %c0_1 = arith.constant 0 : index
    %c0_2 = arith.constant 0 : index
    %1 = vector.load %arg2[%c0_1, %c0_2] : memref<8x128xf32, #tpu.memory_space<vmem>>, vector<8x128xf32>
    %cst = arith.constant dense<0.000000e+00> : vector<8x128xf32>
    %2 = tpu.matmul %0, %1, %cst {dimension_numbers = #tpu.dot_dimension_numbers<[1], [0], [0], [1], [0, 0, 1, 1], [], []>} : vector<8x8xf32>, vector<8x128xf32>, vector<8x128xf32> -> vector<8x128xf32>
    %c0_3 = arith.constant 0 : index
    %c0_4 = arith.constant 0 : index
    %3 = vector.load %arg3[%c0_3, %c0_4] : memref<1x128xf32, #tpu.memory_space<vmem>>, vector<1x128xf32>
    %4 = vector.broadcast %3 : vector<1x128xf32> to vector<8x128xf32>
    %5 = arith.addf %2, %4 : vector<8x128xf32>
    %c0_5 = arith.constant 0 : index
    %c0_6 = arith.constant 0 : index
    %c0_7 = arith.constant 0 : index
    %6 = vector.load %arg4[%c0_5, %c0_6, %c0_7] : memref<6x128x128xf32, #tpu.memory_space<vmem>>, vector<1x128x128xf32>
    %7 = vector.shape_cast %6 : vector<1x128x128xf32> to vector<128x128xf32>
    %cst_8 = arith.constant dense<0.000000e+00> : vector<8x128xf32>
    %8 = tpu.matmul %5, %7, %cst_8 {dimension_numbers = #tpu.dot_dimension_numbers<[1], [0], [0], [1], [0, 0, 1, 1], [], []>} : vector<8x128xf32>, vector<128x128xf32>, vector<8x128xf32> -> vector<8x128xf32>
    %c0_9 = arith.constant 0 : index
    %c0_10 = arith.constant 0 : index
    %c0_11 = arith.constant 0 : index
    %9 = vector.load %arg5[%c0_9, %c0_10, %c0_11] : memref<6x1x128xf32, #tpu.memory_space<vmem>>, vector<1x1x128xf32>
    %10 = vector.shape_cast %9 : vector<1x1x128xf32> to vector<1x128xf32>
    %11 = vector.broadcast %10 : vector<1x128xf32> to vector<8x128xf32>
    %12 = arith.addf %8, %11 : vector<8x128xf32>
    %cst_12 = arith.constant 2.000000e-01 : f32
    %13 = vector.broadcast %cst_12 : f32 to vector<8x128xf32>
    %14 = arith.mulf %13, %12 : vector<8x128xf32>
    %15 = arith.maximumf %12, %14 : vector<8x128xf32>
    %c1 = arith.constant 1 : index
    %c0_13 = arith.constant 0 : index
    %c0_14 = arith.constant 0 : index
    %16 = vector.load %arg4[%c1, %c0_13, %c0_14] : memref<6x128x128xf32, #tpu.memory_space<vmem>>, vector<1x128x128xf32>
    %17 = vector.shape_cast %16 : vector<1x128x128xf32> to vector<128x128xf32>
    %cst_15 = arith.constant dense<0.000000e+00> : vector<8x128xf32>
    %18 = tpu.matmul %15, %17, %cst_15 {dimension_numbers = #tpu.dot_dimension_numbers<[1], [0], [0], [1], [0, 0, 1, 1], [], []>} : vector<8x128xf32>, vector<128x128xf32>, vector<8x128xf32> -> vector<8x128xf32>
    %c1_16 = arith.constant 1 : index
    %c0_17 = arith.constant 0 : index
    %c0_18 = arith.constant 0 : index
    %19 = vector.load %arg5[%c1_16, %c0_17, %c0_18] : memref<6x1x128xf32, #tpu.memory_space<vmem>>, vector<1x1x128xf32>
    %20 = vector.shape_cast %19 : vector<1x1x128xf32> to vector<1x128xf32>
    %21 = vector.broadcast %20 : vector<1x128xf32> to vector<8x128xf32>
    %22 = arith.addf %18, %21 : vector<8x128xf32>
    %cst_19 = arith.constant 2.000000e-01 : f32
    %23 = vector.broadcast %cst_19 : f32 to vector<8x128xf32>
    %24 = arith.mulf %23, %22 : vector<8x128xf32>
    %25 = arith.maximumf %22, %24 : vector<8x128xf32>
    %c2 = arith.constant 2 : index
    %c0_20 = arith.constant 0 : index
    %c0_21 = arith.constant 0 : index
    %26 = vector.load %arg4[%c2, %c0_20, %c0_21] : memref<6x128x128xf32, #tpu.memory_space<vmem>>, vector<1x128x128xf32>
    %27 = vector.shape_cast %26 : vector<1x128x128xf32> to vector<128x128xf32>
    %cst_22 = arith.constant dense<0.000000e+00> : vector<8x128xf32>
    %28 = tpu.matmul %25, %27, %cst_22 {dimension_numbers = #tpu.dot_dimension_numbers<[1], [0], [0], [1], [0, 0, 1, 1], [], []>} : vector<8x128xf32>, vector<128x128xf32>, vector<8x128xf32> -> vector<8x128xf32>
    %c2_23 = arith.constant 2 : index
    %c0_24 = arith.constant 0 : index
    %c0_25 = arith.constant 0 : index
    %29 = vector.load %arg5[%c2_23, %c0_24, %c0_25] : memref<6x1x128xf32, #tpu.memory_space<vmem>>, vector<1x1x128xf32>
    %30 = vector.shape_cast %29 : vector<1x1x128xf32> to vector<1x128xf32>
    %31 = vector.broadcast %30 : vector<1x128xf32> to vector<8x128xf32>
    %32 = arith.addf %28, %31 : vector<8x128xf32>
    %cst_26 = arith.constant 2.000000e-01 : f32
    %33 = vector.broadcast %cst_26 : f32 to vector<8x128xf32>
    %34 = arith.mulf %33, %32 : vector<8x128xf32>
    %35 = arith.maximumf %32, %34 : vector<8x128xf32>
    %36 = arith.addf %5, %35 : vector<8x128xf32>
    %cst_27 = arith.constant 0.707106769 : f32
    %37 = vector.broadcast %cst_27 : f32 to vector<8x128xf32>
    %38 = arith.mulf %36, %37 : vector<8x128xf32>
    %c3 = arith.constant 3 : index
    %c0_28 = arith.constant 0 : index
    %c0_29 = arith.constant 0 : index
    %39 = vector.load %arg4[%c3, %c0_28, %c0_29] : memref<6x128x128xf32, #tpu.memory_space<vmem>>, vector<1x128x128xf32>
    %40 = vector.shape_cast %39 : vector<1x128x128xf32> to vector<128x128xf32>
    %cst_30 = arith.constant dense<0.000000e+00> : vector<8x128xf32>
    %41 = tpu.matmul %38, %40, %cst_30 {dimension_numbers = #tpu.dot_dimension_numbers<[1], [0], [0], [1], [0, 0, 1, 1], [], []>} : vector<8x128xf32>, vector<128x128xf32>, vector<8x128xf32> -> vector<8x128xf32>
    %c3_31 = arith.constant 3 : index
    %c0_32 = arith.constant 0 : index
    %c0_33 = arith.constant 0 : index
    %42 = vector.load %arg5[%c3_31, %c0_32, %c0_33] : memref<6x1x128xf32, #tpu.memory_space<vmem>>, vector<1x1x128xf32>
    %43 = vector.shape_cast %42 : vector<1x1x128xf32> to vector<1x128xf32>
    %44 = vector.broadcast %43 : vector<1x128xf32> to vector<8x128xf32>
    %45 = arith.addf %41, %44 : vector<8x128xf32>
    %cst_34 = arith.constant 2.000000e-01 : f32
    %46 = vector.broadcast %cst_34 : f32 to vector<8x128xf32>
    %47 = arith.mulf %46, %45 : vector<8x128xf32>
    %48 = arith.maximumf %45, %47 : vector<8x128xf32>
    %c4 = arith.constant 4 : index
    %c0_35 = arith.constant 0 : index
    %c0_36 = arith.constant 0 : index
    %49 = vector.load %arg4[%c4, %c0_35, %c0_36] : memref<6x128x128xf32, #tpu.memory_space<vmem>>, vector<1x128x128xf32>
    %50 = vector.shape_cast %49 : vector<1x128x128xf32> to vector<128x128xf32>
    %cst_37 = arith.constant dense<0.000000e+00> : vector<8x128xf32>
    %51 = tpu.matmul %48, %50, %cst_37 {dimension_numbers = #tpu.dot_dimension_numbers<[1], [0], [0], [1], [0, 0, 1, 1], [], []>} : vector<8x128xf32>, vector<128x128xf32>, vector<8x128xf32> -> vector<8x128xf32>
    %c4_38 = arith.constant 4 : index
    %c0_39 = arith.constant 0 : index
    %c0_40 = arith.constant 0 : index
    %52 = vector.load %arg5[%c4_38, %c0_39, %c0_40] : memref<6x1x128xf32, #tpu.memory_space<vmem>>, vector<1x1x128xf32>
    %53 = vector.shape_cast %52 : vector<1x1x128xf32> to vector<1x128xf32>
    %54 = vector.broadcast %53 : vector<1x128xf32> to vector<8x128xf32>
    %55 = arith.addf %51, %54 : vector<8x128xf32>
    %cst_41 = arith.constant 2.000000e-01 : f32
    %56 = vector.broadcast %cst_41 : f32 to vector<8x128xf32>
    %57 = arith.mulf %56, %55 : vector<8x128xf32>
    %58 = arith.maximumf %55, %57 : vector<8x128xf32>
    %c5 = arith.constant 5 : index
    %c0_42 = arith.constant 0 : index
    %c0_43 = arith.constant 0 : index
    %59 = vector.load %arg4[%c5, %c0_42, %c0_43] : memref<6x128x128xf32, #tpu.memory_space<vmem>>, vector<1x128x128xf32>
    %60 = vector.shape_cast %59 : vector<1x128x128xf32> to vector<128x128xf32>
    %cst_44 = arith.constant dense<0.000000e+00> : vector<8x128xf32>
    %61 = tpu.matmul %58, %60, %cst_44 {dimension_numbers = #tpu.dot_dimension_numbers<[1], [0], [0], [1], [0, 0, 1, 1], [], []>} : vector<8x128xf32>, vector<128x128xf32>, vector<8x128xf32> -> vector<8x128xf32>
    %c5_45 = arith.constant 5 : index
    %c0_46 = arith.constant 0 : index
    %c0_47 = arith.constant 0 : index
    %62 = vector.load %arg5[%c5_45, %c0_46, %c0_47] : memref<6x1x128xf32, #tpu.memory_space<vmem>>, vector<1x1x128xf32>
    %63 = vector.shape_cast %62 : vector<1x1x128xf32> to vector<1x128xf32>
    %64 = vector.broadcast %63 : vector<1x128xf32> to vector<8x128xf32>
    %65 = arith.addf %61, %64 : vector<8x128xf32>
    %cst_48 = arith.constant 2.000000e-01 : f32
    %66 = vector.broadcast %cst_48 : f32 to vector<8x128xf32>
    %67 = arith.mulf %66, %65 : vector<8x128xf32>
    %68 = arith.maximumf %65, %67 : vector<8x128xf32>
    %69 = arith.addf %38, %68 : vector<8x128xf32>
    %cst_49 = arith.constant 0.707106769 : f32
    %70 = vector.broadcast %cst_49 : f32 to vector<8x128xf32>
    %71 = arith.mulf %69, %70 : vector<8x128xf32>
    %c0_50 = arith.constant 0 : index
    %c0_51 = arith.constant 0 : index
    %72 = vector.load %arg6[%c0_50, %c0_51] : memref<8x128xf32, #tpu.memory_space<vmem>>, vector<8x128xf32>
    tpu.vector_store %arg6[%c0_50, %c0_51], %71 {strides = array<i32>} : memref<8x128xf32, #tpu.memory_space<vmem>>, vector<8x128xf32>,
    return
  }
  func.func @transform_0(%arg0: i32) -> (i32, i32) {
    %c0_i32 = arith.constant 0 : i32
    %c0_i32_0 = arith.constant 0 : i32
    return %arg0, %c0_i32 : i32, i32
  }
  func.func @transform_1(%arg0: i32) -> (i32, i32) {
    %c0_i32 = arith.constant 0 : i32
    %c0_i32_0 = arith.constant 0 : i32
    %c0_i32_1 = arith.constant 0 : i32
    return %c0_i32, %c0_i32_0 : i32, i32
  }
  func.func @transform_2(%arg0: i32) -> (i32, i32) {
    %c0_i32 = arith.constant 0 : i32
    %c0_i32_0 = arith.constant 0 : i32
    %c0_i32_1 = arith.constant 0 : i32
    return %c0_i32, %c0_i32_0 : i32, i32
  }
  func.func @transform_3(%arg0: i32) -> (i32, i32, i32) {
    %c0_i32 = arith.constant 0 : i32
    %c0_i32_0 = arith.constant 0 : i32
    %c0_i32_1 = arith.constant 0 : i32
    %c0_i32_2 = arith.constant 0 : i32
    return %c0_i32, %c0_i32_0, %c0_i32_1 : i32, i32, i32
  }
  func.func @transform_4(%arg0: i32) -> (i32, i32, i32) {
    %c0_i32 = arith.constant 0 : i32
    %c0_i32_0 = arith.constant 0 : i32
    %c0_i32_1 = arith.constant 0 : i32
    %c0_i32_2 = arith.constant 0 : i32
    return %c0_i32, %c0_i32_0, %c0_i32_1 : i32, i32, i32
  }
  func.func @transform_5(%arg0: i32) -> (i32, i32) {
    %c0_i32 = arith.constant 0 : i32
    %c0_i32_0 = arith.constant 0 : i32
    return %arg0, %c0_i32 : i32, i32
  }
}

</mosaic_0001>

<llo_original>
// kernel: tpu_custom_call.1
$region0: #{tpu_custom_call.1}
  #allocation0 [shape = 'u32[]', space=smem, size = 0x4, offset = 0x4, fixed_abs, tag = 'smem constant byte address 0x4 - core index']
  #allocation1 [shape = 'u32[144,128]{1,0:T(1,128)}', space=vmem, size = 0x12000, scoped, tag = 'internal scratch']
  %s0 = inlined_call_operand.hbm [shape: f32[8,8], index: 0, kind: input, shape index: {}]
  %s1 = inlined_call_operand.hbm [shape: f32[8,128], index: 1, kind: input, shape index: {}]
  %s2 = inlined_call_operand.vmem [shape: f32[1,128], index: 2, kind: input, shape index: {}]
  %s3 = inlined_call_operand.hbm [shape: f32[6,128,128], index: 3, kind: input, shape index: {}]
  %s4 = inlined_call_operand.vmem [shape: f32[6,1,128], index: 4, kind: input, shape index: {}]
  %s5 = inlined_call_operand.hbm [shape: f32[8,128], index: 5, kind: output, shape index: {}]
  %s6 = sld [smem:[#allocation0]]
  $region42: #{tpu_custom_call.1} parent=0
    _
  %s8 = ssub.s32 1, %s6
  %s9 = scalar_select 0, %s8, %s6
  $region1: #{tpu_custom_call.1} parent=0
    #allocation2 [shape = 'u8[4096]{0}', space=vmem, size = 0x1000, scoped, tag = 'input window, operand 0, single buffered']
    #allocation3 [shape = 's32[1]{0}', space=sflag, size = 0x4, scoped, tag = 'scoped memory for tpu_custom_call.1']
    #allocation4 [shape = 's32[1]{0}', space=sflag, size = 0x4, scoped, tag = 'scoped memory for tpu_custom_call.1']
    #allocation5 [shape = 'u8[4096]{0}', space=vmem, size = 0x1000, scoped, tag = 'input window, operand 1, single buffered']
    #allocation6 [shape = 's32[1]{0}', space=sflag, size = 0x4, scoped, tag = 'scoped memory for tpu_custom_call.1']
    #allocation7 [shape = 'u8[393216]{0}', space=vmem, size = 0x60000, scoped, tag = 'input window, operand 3, single buffered']
    #allocation8 [shape = 'u8[4096]{0}', space=vmem, size = 0x1000, scoped, tag = 'output window, operand 0, single buffered']
    %10 = vsyncpa [#allocation3], 0
    %11 = vsyncpa [#allocation6], 0
    %12 = vsyncpa [#allocation4], 0
    // Predicated region
    $region2: #{tpu_custom_call.1} parent=1 // pred_check
      _
    $region3: #{tpu_custom_call.1} parent=1 // pred_check_branch
      %14 = sbr.rel (0) target = $region5
    $region4: #{tpu_custom_call.1} parent=1 // pred_region
      %s16 = ssub.s32 128, 128
      %17 = vsyncadd [#allocation3], %s16
      %s19 = sshll.u32 [#allocation2], 4
      %s20 = int_to_ptr.vmem [resolvable:$true] %s19
      %22 = dma.hbm_to_vmem [thread:$0]  %s0, 128, %s20, [#allocation3]
    $region5: #{tpu_custom_call.1} parent=1 // pred_fallthru
      _
    // Predicated region
    $region6: #{tpu_custom_call.1} parent=1 // pred_check
      _
    $region7: #{tpu_custom_call.1} parent=1 // pred_check_branch
      %24 = sbr.rel (0) target = $region9
    $region8: #{tpu_custom_call.1} parent=1 // pred_region
      %s26 = ssub.s32 128, 128
      %27 = vsyncadd [#allocation6], %s26
      %s29 = sshll.u32 [#allocation5], 4
      %s30 = int_to_ptr.vmem [resolvable:$true] %s29
      %32 = dma.hbm_to_vmem [thread:$0]  %s1, 128, %s30, [#allocation6]
    $region9: #{tpu_custom_call.1} parent=1 // pred_fallthru
      _
    // Predicated region
    $region10: #{tpu_custom_call.1} parent=1 // pred_check
      _
    $region11: #{tpu_custom_call.1} parent=1 // pred_check_branch
      %34 = sbr.rel (0) target = $region13
    $region12: #{tpu_custom_call.1} parent=1 // pred_region
      _
    $region13: #{tpu_custom_call.1} parent=1 // pred_fallthru
      _
    // Predicated region
    $region14: #{tpu_custom_call.1} parent=1 // pred_check
      _
    $region15: #{tpu_custom_call.1} parent=1 // pred_check_branch
      %36 = sbr.rel (0) target = $region17
    $region16: #{tpu_custom_call.1} parent=1 // pred_region
      %s38 = ssub.s32 12288, 12288
      %39 = vsyncadd [#allocation6], %s38
      %s40 = sshll.u32 [#allocation7], 4
      %s41 = int_to_ptr.vmem [resolvable:$true] %s40
      %46 = dma.hbm_to_vmem [thread:$0]  %s3, 12288, %s41, [#allocation6], 128, 128, 8
    $region17: #{tpu_custom_call.1} parent=1 // pred_fallthru
      _
    // Predicated region
    $region18: #{tpu_custom_call.1} parent=1 // pred_check
      _
    $region19: #{tpu_custom_call.1} parent=1 // pred_check_branch
      %48 = sbr.rel (0) target = $region21
    $region20: #{tpu_custom_call.1} parent=1 // pred_region
      _
    $region21: #{tpu_custom_call.1} parent=1 // pred_fallthru
      _
    // Predicated region
    $region22: #{tpu_custom_call.1} parent=1 // pred_check
      _
    $region23: #{tpu_custom_call.1} parent=1 // pred_check_branch
      %50 = sbr.rel (0) target = $region25
    $region24: #{tpu_custom_call.1} parent=1 // pred_region
      %51 = dma.done [#allocation3], 128
    $region25: #{tpu_custom_call.1} parent=1 // pred_fallthru
      _
    // Predicated region
    $region26: #{tpu_custom_call.1} parent=1 // pred_check
      _
    $region27: #{tpu_custom_call.1} parent=1 // pred_check_branch
      %53 = sbr.rel (0) target = $region29
    $region28: #{tpu_custom_call.1} parent=1 // pred_region
      %54 = dma.done [#allocation6], 128
    $region29: #{tpu_custom_call.1} parent=1 // pred_fallthru
      _
    // Predicated region
    $region30: #{tpu_custom_call.1} parent=1 // pred_check
      _
    $region31: #{tpu_custom_call.1} parent=1 // pred_check_branch
      %56 = sbr.rel (0) target = $region33
    $region32: #{tpu_custom_call.1} parent=1 // pred_region
      %57 = dma.done [#allocation6], 12288
    $region33: #{tpu_custom_call.1} parent=1 // pred_fallthru
      _
    %v58 = vld [vmem:[#allocation2] sm:$0xff]
    %v59 = vld [vmem:[#allocation5] sm:$0xff]
    %v60 = vld [vmem:[%s2] sm:$0x1]
    %v62 = vlaneseq
    %v63 = vshrl.u32 %v62, 7
    %v64 = vsub.s32 0, %v63
    %v65 = vrot.slane %v60, %v64
    %vm67 = vcmask 64512
    %v69 = vsel %vm67, %v58, 0
    %71 = vmatprep.subr.mxu0 0.0
    %72 = vmatpush1.msra.mxu0 %v59
    %73 = vmatprep.subr.mxu0 0.0
    %74 = vmatpush1.msra.mxu0 0.0
    %75 = vmatprep.subr.mxu0 0.0
    %76 = vmatpush1.msra.mxu0 0.0
    %77 = vmatprep.subr.mxu0 0.0
    %78 = vmatpush1.msra.mxu0 0.0
    %79 = vmatprep.subr.mxu0 0.0
    %80 = vmatpush1.msra.mxu0 0.0
    %81 = vmatprep.subr.mxu0 0.0
    %82 = vmatpush1.msra.mxu0 0.0
    %83 = vmatprep.subr.mxu0 0.0
    %84 = vmatpush1.msra.mxu0 0.0
    %85 = vmatprep.subr.mxu0 0.0
    %86 = vmatpush1.msra.mxu0 0.0
    %87 = vmatprep.subr.mxu0 0.0
    %88 = vmatpush1.msra.mxu0 0.0
    %89 = vmatprep.subr.mxu0 0.0
    %90 = vmatpush1.msra.mxu0 0.0
    %91 = vmatprep.subr.mxu0 0.0
    %92 = vmatpush1.msra.mxu0 0.0
    %93 = vmatprep.subr.mxu0 0.0
    %94 = vmatpush1.msra.mxu0 0.0
    %95 = vmatprep.subr.mxu0 0.0
    %96 = vmatpush1.msra.mxu0 0.0
    %97 = vmatprep.subr.mxu0 0.0
    %98 = vmatpush1.msra.mxu0 0.0
    %99 = vmatprep.subr.mxu0 0.0
    %100 = vmatpush1.msra.mxu0 0.0
    %101 = vmatprep.subr.mxu0 0.0
    %102 = vmatpush1.msra.mxu0 0.0
    %103 = vmatprep.subr.mxu0 0.0
    %104 = vmatpush1.msra.mxu0 0.0
    %105 = vmatprep.subr.mxu0 0.0
    %106 = vmatpush1.msra.mxu0 0.0
    %107 = vmatprep.subr.mxu0 0.0
    %108 = vmatpush1.msra.mxu0 0.0
    %109 = vmatprep.subr.mxu0 0.0
    %110 = vmatpush1.msra.mxu0 0.0
    %111 = vmatprep.subr.mxu0 0.0
    %112 = vmatpush1.msra.mxu0 0.0
    %113 = vmatprep.subr.mxu0 0.0
    %114 = vmatpush1.msra.mxu0 0.0
    %115 = vmatprep.subr.mxu0 0.0
    %116 = vmatpush1.msra.mxu0 0.0
    %117 = vmatprep.subr.mxu0 0.0
    %118 = vmatpush1.msra.mxu0 0.0
    %119 = vmatprep.subr.mxu0 0.0
    %120 = vmatpush1.msra.mxu0 0.0
    %121 = vmatprep.subr.mxu0 0.0
    %122 = vmatpush1.msra.mxu0 0.0
    %123 = vmatprep.subr.mxu0 0.0
    %124 = vmatpush1.msra.mxu0 0.0
    %125 = vmatprep.subr.mxu0 0.0
    %126 = vmatpush1.msra.mxu0 0.0
    %127 = vmatprep.subr.mxu0 0.0
    %128 = vmatpush1.msra.mxu0 0.0
    %129 = vmatprep.subr.mxu0 0.0
    %130 = vmatpush1.msra.mxu0 0.0
    %131 = vmatprep.subr.mxu0 0.0
    %132 = vmatpush1.msra.mxu0 0.0
    %133 = vmatprep.subr.mxu0 0.0
    %134 = vmatpush1.msra.mxu0 0.0
    %135 = vmatprep.mubr.f32.mxu0 0.0
    %136 = vmatmul.mubr.f32.gmra.mrb[0].mxu0 %v69
    %v137 = vpop.f32.mrb[0].mxu0
    %v138 = vadd.f32 %v65, %v137
    %v139 = vpop.f32.mrb[0].mxu0
    %140 = vdwg.mxu0
    %v141 = vld [vmem:[#allocation7] sm:$0xff]
    %v142 = vld [vmem:[#allocation7 + $0x8] sm:$0xff]
    %v143 = vld [vmem:[#allocation7 + $0x10] sm:$0xff]
    %v144 = vld [vmem:[#allocation7 + $0x18] sm:$0xff]
    %v145 = vld [vmem:[#allocation7 + $0x20] sm:$0xff]
    %v146 = vld [vmem:[#allocation7 + $0x28] sm:$0xff]
    %v147 = vld [vmem:[#allocation7 + $0x30] sm:$0xff]
    %v148 = vld [vmem:[#allocation7 + $0x38] sm:$0xff]
    %v149 = vld [vmem:[#allocation7 + $0x40] sm:$0xff]
    %v150 = vld [vmem:[#allocation7 + $0x48] sm:$0xff]
    %v151 = vld [vmem:[#allocation7 + $0x50] sm:$0xff]
    %v152 = vld [vmem:[#allocation7 + $0x58] sm:$0xff]
    %v153 = vld [vmem:[#allocation7 + $0x60] sm:$0xff]
    %v154 = vld [vmem:[#allocation7 + $0x68] sm:$0xff]
    %v155 = vld [vmem:[#allocation7 + $0x70] sm:$0xff]
    %v156 = vld [vmem:[#allocation7 + $0x78] sm:$0xff]
    %v157 = vld [vmem:[%s4] sm:$0x1]
    %v159 = vlaneseq
    %v160 = vshrl.u32 %v159, 7
    %v161 = vsub.s32 0, %v160
    %v162 = vrot.slane %v157, %v161
    %164 = vmatprep.subr.mxu0 0.0
    %165 = vmatpush1.msra.mxu0 %v141
    %166 = vmatprep.subr.mxu0 0.0
    %167 = vmatpush1.msra.mxu0 %v142
    %168 = vmatprep.subr.mxu0 0.0
    %169 = vmatpush1.msra.mxu0 %v143
    %170 = vmatprep.subr.mxu0 0.0
    %171 = vmatpush1.msra.mxu0 %v144
    %172 = vmatprep.subr.mxu0 0.0
    %173 = vmatpush1.msra.mxu0 %v145
    %174 = vmatprep.subr.mxu0 0.0
    %175 = vmatpush1.msra.mxu0 %v146
    %176 = vmatprep.subr.mxu0 0.0
    %177 = vmatpush1.msra.mxu0 %v147
    %178 = vmatprep.subr.mxu0 0.0
    %179 = vmatpush1.msra.mxu0 %v148
    %180 = vmatprep.subr.mxu0 0.0
    %181 = vmatpush1.msra.mxu0 %v149
    %182 = vmatprep.subr.mxu0 0.0
    %183 = vmatpush1.msra.mxu0 %v150
    %184 = vmatprep.subr.mxu0 0.0
    %185 = vmatpush1.msra.mxu0 %v151
    %186 = vmatprep.subr.mxu0 0.0
    %187 = vmatpush1.msra.mxu0 %v152
    %188 = vmatprep.subr.mxu0 0.0
    %189 = vmatpush1.msra.mxu0 %v153
    %190 = vmatprep.subr.mxu0 0.0
    %191 = vmatpush1.msra.mxu0 %v154
    %192 = vmatprep.subr.mxu0 0.0
    %193 = vmatpush1.msra.mxu0 %v155
    %194 = vmatprep.subr.mxu0 0.0
    %195 = vmatpush1.msra.mxu0 %v156
    %196 = vmatprep.subr.mxu0 0.0
    %197 = vmatpush1.msra.mxu0 0.0
    %198 = vmatprep.subr.mxu0 0.0
    %199 = vmatpush1.msra.mxu0 0.0
    %200 = vmatprep.subr.mxu0 0.0
    %201 = vmatpush1.msra.mxu0 0.0
    %202 = vmatprep.subr.mxu0 0.0
    %203 = vmatpush1.msra.mxu0 0.0
    %204 = vmatprep.subr.mxu0 0.0
    %205 = vmatpush1.msra.mxu0 0.0
    %206 = vmatprep.subr.mxu0 0.0
    %207 = vmatpush1.msra.mxu0 0.0
    %208 = vmatprep.subr.mxu0 0.0
    %209 = vmatpush1.msra.mxu0 0.0
    %210 = vmatprep.subr.mxu0 0.0
    %211 = vmatpush1.msra.mxu0 0.0
    %212 = vmatprep.subr.mxu0 0.0
    %213 = vmatpush1.msra.mxu0 0.0
    %214 = vmatprep.subr.mxu0 0.0
    %215 = vmatpush1.msra.mxu0 0.0
    %216 = vmatprep.subr.mxu0 0.0
    %217 = vmatpush1.msra.mxu0 0.0
    %218 = vmatprep.subr.mxu0 0.0
    %219 = vmatpush1.msra.mxu0 0.0
    %220 = vmatprep.subr.mxu0 0.0
    %221 = vmatpush1.msra.mxu0 0.0
    %222 = vmatprep.subr.mxu0 0.0
    %223 = vmatpush1.msra.mxu0 0.0
    %224 = vmatprep.subr.mxu0 0.0
    %225 = vmatpush1.msra.mxu0 0.0
    %226 = vmatprep.subr.mxu0 0.0
    %227 = vmatpush1.msra.mxu0 0.0
    %228 = vmatprep.mubr.f32.mxu0 0.0
    %229 = vmatmul.mubr.f32.gmra.mrb[0].mxu0 %v138
    %v230 = vpop.f32.mrb[0].mxu0
    %v231 = vadd.f32 %v162, %v230
    %v232 = vpop.f32.mrb[0].mxu0
    %233 = vdwg.mxu0
    %v234 = vmul.f32 %v231, 0.2
    %v235 = vmax.f32 %v231, %v234
    %s236 = scalar_lea.vmem [#allocation7], 128
    %v237 = vld [vmem:[%s236] sm:$0xff]
    %v238 = vld [vmem:[%s236 + $0x8] sm:$0xff]
    %v239 = vld [vmem:[%s236 + $0x10] sm:$0xff]
    %v240 = vld [vmem:[%s236 + $0x18] sm:$0xff]
    %v241 = vld [vmem:[%s236 + $0x20] sm:$0xff]
    %v242 = vld [vmem:[%s236 + $0x28] sm:$0xff]
    %v243 = vld [vmem:[%s236 + $0x30] sm:$0xff]
    %v244 = vld [vmem:[%s236 + $0x38] sm:$0xff]
    %v245 = vld [vmem:[%s236 + $0x40] sm:$0xff]
    %v246 = vld [vmem:[%s236 + $0x48] sm:$0xff]
    %v247 = vld [vmem:[%s236 + $0x50] sm:$0xff]
    %v248 = vld [vmem:[%s236 + $0x58] sm:$0xff]
    %v249 = vld [vmem:[%s236 + $0x60] sm:$0xff]
    %v250 = vld [vmem:[%s236 + $0x68] sm:$0xff]
    %v251 = vld [vmem:[%s236 + $0x70] sm:$0xff]
    %v252 = vld [vmem:[%s236 + $0x78] sm:$0xff]
    %s253 = scalar_lea.vmem %s4, 1
    %v254 = vld [vmem:[%s253] sm:$0x1]
    %v256 = vlaneseq
    %v257 = vshrl.u32 %v256, 7
    %v258 = vsub.s32 0, %v257
    %v259 = vrot.slane %v254, %v258
    %261 = vmatprep.subr.mxu0 0.0
    %262 = vmatpush1.msra.mxu0 %v237
    %263 = vmatprep.subr.mxu0 0.0
    %264 = vmatpush1.msra.mxu0 %v238
    %265 = vmatprep.subr.mxu0 0.0
    %266 = vmatpush1.msra.mxu0 %v239
    %267 = vmatprep.subr.mxu0 0.0
    %268 = vmatpush1.msra.mxu0 %v240
    %269 = vmatprep.subr.mxu0 0.0
    %270 = vmatpush1.msra.mxu0 %v241
    %271 = vmatprep.subr.mxu0 0.0
    %272 = vmatpush1.msra.mxu0 %v242
    %273 = vmatprep.subr.mxu0 0.0
    %274 = vmatpush1.msra.mxu0 %v243
    %275 = vmatprep.subr.mxu0 0.0
    %276 = vmatpush1.msra.mxu0 %v244
    %277 = vmatprep.subr.mxu0 0.0
    %278 = vmatpush1.msra.mxu0 %v245
    %279 = vmatprep.subr.mxu0 0.0
    %280 = vmatpush1.msra.mxu0 %v246
    %281 = vmatprep.subr.mxu0 0.0
    %282 = vmatpush1.msra.mxu0 %v247
    %283 = vmatprep.subr.mxu0 0.0
    %284 = vmatpush1.msra.mxu0 %v248
    %285 = vmatprep.subr.mxu0 0.0
    %286 = vmatpush1.msra.mxu0 %v249
    %287 = vmatprep.subr.mxu0 0.0
    %288 = vmatpush1.msra.mxu0 %v250
    %289 = vmatprep.subr.mxu0 0.0
    %290 = vmatpush1.msra.mxu0 %v251
    %291 = vmatprep.subr.mxu0 0.0
    %292 = vmatpush1.msra.mxu0 %v252
    %293 = vmatprep.subr.mxu0 0.0
    %294 = vmatpush1.msra.mxu0 0.0
    %295 = vmatprep.subr.mxu0 0.0
    %296 = vmatpush1.msra.mxu0 0.0
    %297 = vmatprep.subr.mxu0 0.0
    %298 = vmatpush1.msra.mxu0 0.0
    %299 = vmatprep.subr.mxu0 0.0
    %300 = vmatpush1.msra.mxu0 0.0
    %301 = vmatprep.subr.mxu0 0.0
    %302 = vmatpush1.msra.mxu0 0.0
    %303 = vmatprep.subr.mxu0 0.0
    %304 = vmatpush1.msra.mxu0 0.0
    %305 = vmatprep.subr.mxu0 0.0
    %306 = vmatpush1.msra.mxu0 0.0
    %307 = vmatprep.subr.mxu0 0.0
    %308 = vmatpush1.msra.mxu0 0.0
    %309 = vmatprep.subr.mxu0 0.0
    %310 = vmatpush1.msra.mxu0 0.0
    %311 = vmatprep.subr.mxu0 0.0
    %312 = vmatpush1.msra.mxu0 0.0
    %313 = vmatprep.subr.mxu0 0.0
    %314 = vmatpush1.msra.mxu0 0.0
    %315 = vmatprep.subr.mxu0 0.0
    %316 = vmatpush1.msra.mxu0 0.0
    %317 = vmatprep.subr.mxu0 0.0
    %318 = vmatpush1.msra.mxu0 0.0
    %319 = vmatprep.subr.mxu0 0.0
    %320 = vmatpush1.msra.mxu0 0.0
    %321 = vmatprep.subr.mxu0 0.0
    %322 = vmatpush1.msra.mxu0 0.0
    %323 = vmatprep.subr.mxu0 0.0
    %324 = vmatpush1.msra.mxu0 0.0
    %325 = vmatprep.mubr.f32.mxu0 0.0
    %326 = vmatmul.mubr.f32.gmra.mrb[0].mxu0 %v235
    %v327 = vpop.f32.mrb[0].mxu0
    %v328 = vadd.f32 %v259, %v327
    %v329 = vpop.f32.mrb[0].mxu0
    %330 = vdwg.mxu0
    %v331 = vmul.f32 %v328, 0.2
    %v332 = vmax.f32 %v328, %v331
    %s333 = scalar_lea.vmem [#allocation7], 256
    %v334 = vld [vmem:[%s333] sm:$0xff]
    %v335 = vld [vmem:[%s333 + $0x8] sm:$0xff]
    %v336 = vld [vmem:[%s333 + $0x10] sm:$0xff]
    %v337 = vld [vmem:[%s333 + $0x18] sm:$0xff]
    %v338 = vld [vmem:[%s333 + $0x20] sm:$0xff]
    %v339 = vld [vmem:[%s333 + $0x28] sm:$0xff]
    %v340 = vld [vmem:[%s333 + $0x30] sm:$0xff]
    %v341 = vld [vmem:[%s333 + $0x38] sm:$0xff]
    %v342 = vld [vmem:[%s333 + $0x40] sm:$0xff]
    %v343 = vld [vmem:[%s333 + $0x48] sm:$0xff]
    %v344 = vld [vmem:[%s333 + $0x50] sm:$0xff]
    %v345 = vld [vmem:[%s333 + $0x58] sm:$0xff]
    %v346 = vld [vmem:[%s333 + $0x60] sm:$0xff]
    %v347 = vld [vmem:[%s333 + $0x68] sm:$0xff]
    %v348 = vld [vmem:[%s333 + $0x70] sm:$0xff]
    %v349 = vld [vmem:[%s333 + $0x78] sm:$0xff]
    %s350 = scalar_lea.vmem %s4, 2
    %v351 = vld [vmem:[%s350] sm:$0x1]
    %v353 = vlaneseq
    %v354 = vshrl.u32 %v353, 7
    %v355 = vsub.s32 0, %v354
    %v356 = vrot.slane %v351, %v355
    %358 = vmatprep.subr.mxu0 0.0
    %359 = vmatpush1.msra.mxu0 %v334
    %360 = vmatprep.subr.mxu0 0.0
    %361 = vmatpush1.msra.mxu0 %v335
    %362 = vmatprep.subr.mxu0 0.0
    %363 = vmatpush1.msra.mxu0 %v336
    %364 = vmatprep.subr.mxu0 0.0
    %365 = vmatpush1.msra.mxu0 %v337
    %366 = vmatprep.subr.mxu0 0.0
    %367 = vmatpush1.msra.mxu0 %v338
    %368 = vmatprep.subr.mxu0 0.0
    %369 = vmatpush1.msra.mxu0 %v339
    %370 = vmatprep.subr.mxu0 0.0
    %371 = vmatpush1.msra.mxu0 %v340
    %372 = vmatprep.subr.mxu0 0.0
    %373 = vmatpush1.msra.mxu0 %v341
    %374 = vmatprep.subr.mxu0 0.0
    %375 = vmatpush1.msra.mxu0 %v342
    %376 = vmatprep.subr.mxu0 0.0
    %377 = vmatpush1.msra.mxu0 %v343
    %378 = vmatprep.subr.mxu0 0.0
    %379 = vmatpush1.msra.mxu0 %v344
    %380 = vmatprep.subr.mxu0 0.0
    %381 = vmatpush1.msra.mxu0 %v345
    %382 = vmatprep.subr.mxu0 0.0
    %383 = vmatpush1.msra.mxu0 %v346
    %384 = vmatprep.subr.mxu0 0.0
    %385 = vmatpush1.msra.mxu0 %v347
    %386 = vmatprep.subr.mxu0 0.0
    %387 = vmatpush1.msra.mxu0 %v348
    %388 = vmatprep.subr.mxu0 0.0
    %389 = vmatpush1.msra.mxu0 %v349
    %390 = vmatprep.subr.mxu0 0.0
    %391 = vmatpush1.msra.mxu0 0.0
    %392 = vmatprep.subr.mxu0 0.0
    %393 = vmatpush1.msra.mxu0 0.0
    %394 = vmatprep.subr.mxu0 0.0
    %395 = vmatpush1.msra.mxu0 0.0
    %396 = vmatprep.subr.mxu0 0.0
    %397 = vmatpush1.msra.mxu0 0.0
    %398 = vmatprep.subr.mxu0 0.0
    %399 = vmatpush1.msra.mxu0 0.0
    %400 = vmatprep.subr.mxu0 0.0
    %401 = vmatpush1.msra.mxu0 0.0
    %402 = vmatprep.subr.mxu0 0.0
    %403 = vmatpush1.msra.mxu0 0.0
    %404 = vmatprep.subr.mxu0 0.0
    %405 = vmatpush1.msra.mxu0 0.0
    %406 = vmatprep.subr.mxu0 0.0
    %407 = vmatpush1.msra.mxu0 0.0
    %408 = vmatprep.subr.mxu0 0.0
    %409 = vmatpush1.msra.mxu0 0.0
    %410 = vmatprep.subr.mxu0 0.0
    %411 = vmatpush1.msra.mxu0 0.0
    %412 = vmatprep.subr.mxu0 0.0
    %413 = vmatpush1.msra.mxu0 0.0
    %414 = vmatprep.subr.mxu0 0.0
    %415 = vmatpush1.msra.mxu0 0.0
    %416 = vmatprep.subr.mxu0 0.0
    %417 = vmatpush1.msra.mxu0 0.0
    %418 = vmatprep.subr.mxu0 0.0
    %419 = vmatpush1.msra.mxu0 0.0
    %420 = vmatprep.subr.mxu0 0.0
    %421 = vmatpush1.msra.mxu0 0.0
    %422 = vmatprep.mubr.f32.mxu0 0.0
    %423 = vmatmul.mubr.f32.gmra.mrb[0].mxu0 %v332
    %v424 = vpop.f32.mrb[0].mxu0
    %v425 = vadd.f32 %v356, %v424
    %v426 = vpop.f32.mrb[0].mxu0
    %427 = vdwg.mxu0
    %v428 = vmul.f32 %v425, 0.2
    %v429 = vmax.f32 %v425, %v428
    %v430 = vadd.f32 %v138, %v429
    %v431 = vmul.f32 %v430, 0.70710677
    %s432 = scalar_lea.vmem [#allocation7], 384
    %v433 = vld [vmem:[%s432] sm:$0xff]
    %v434 = vld [vmem:[%s432 + $0x8] sm:$0xff]
    %v435 = vld [vmem:[%s432 + $0x10] sm:$0xff]
    %v436 = vld [vmem:[%s432 + $0x18] sm:$0xff]
    %v437 = vld [vmem:[%s432 + $0x20] sm:$0xff]
    %v438 = vld [vmem:[%s432 + $0x28] sm:$0xff]
    %v439 = vld [vmem:[%s432 + $0x30] sm:$0xff]
    %v440 = vld [vmem:[%s432 + $0x38] sm:$0xff]
    %v441 = vld [vmem:[%s432 + $0x40] sm:$0xff]
    %v442 = vld [vmem:[%s432 + $0x48] sm:$0xff]
    %v443 = vld [vmem:[%s432 + $0x50] sm:$0xff]
    %v444 = vld [vmem:[%s432 + $0x58] sm:$0xff]
    %v445 = vld [vmem:[%s432 + $0x60] sm:$0xff]
    %v446 = vld [vmem:[%s432 + $0x68] sm:$0xff]
    %v447 = vld [vmem:[%s432 + $0x70] sm:$0xff]
    %v448 = vld [vmem:[%s432 + $0x78] sm:$0xff]
    %s449 = scalar_lea.vmem %s4, 3
    %v450 = vld [vmem:[%s449] sm:$0x1]
    %v452 = vlaneseq
    %v453 = vshrl.u32 %v452, 7
    %v454 = vsub.s32 0, %v453
    %v455 = vrot.slane %v450, %v454
    %457 = vmatprep.subr.mxu0 0.0
    %458 = vmatpush1.msra.mxu0 %v433
    %459 = vmatprep.subr.mxu0 0.0
    %460 = vmatpush1.msra.mxu0 %v434
    %461 = vmatprep.subr.mxu0 0.0
    %462 = vmatpush1.msra.mxu0 %v435
    %463 = vmatprep.subr.mxu0 0.0
    %464 = vmatpush1.msra.mxu0 %v436
    %465 = vmatprep.subr.mxu0 0.0
    %466 = vmatpush1.msra.mxu0 %v437
    %467 = vmatprep.subr.mxu0 0.0
    %468 = vmatpush1.msra.mxu0 %v438
    %469 = vmatprep.subr.mxu0 0.0
    %470 = vmatpush1.msra.mxu0 %v439
    %471 = vmatprep.subr.mxu0 0.0
    %472 = vmatpush1.msra.mxu0 %v440
    %473 = vmatprep.subr.mxu0 0.0
    %474 = vmatpush1.msra.mxu0 %v441
    %475 = vmatprep.subr.mxu0 0.0
    %476 = vmatpush1.msra.mxu0 %v442
    %477 = vmatprep.subr.mxu0 0.0
    %478 = vmatpush1.msra.mxu0 %v443
    %479 = vmatprep.subr.mxu0 0.0
    %480 = vmatpush1.msra.mxu0 %v444
    %481 = vmatprep.subr.mxu0 0.0
    %482 = vmatpush1.msra.mxu0 %v445
    %483 = vmatprep.subr.mxu0 0.0
    %484 = vmatpush1.msra.mxu0 %v446
    %485 = vmatprep.subr.mxu0 0.0
    %486 = vmatpush1.msra.mxu0 %v447
    %487 = vmatprep.subr.mxu0 0.0
    %488 = vmatpush1.msra.mxu0 %v448
    %489 = vmatprep.subr.mxu0 0.0
    %490 = vmatpush1.msra.mxu0 0.0
    %491 = vmatprep.subr.mxu0 0.0
    %492 = vmatpush1.msra.mxu0 0.0
    %493 = vmatprep.subr.mxu0 0.0
    %494 = vmatpush1.msra.mxu0 0.0
    %495 = vmatprep.subr.mxu0 0.0
    %496 = vmatpush1.msra.mxu0 0.0
    %497 = vmatprep.subr.mxu0 0.0
    %498 = vmatpush1.msra.mxu0 0.0
    %499 = vmatprep.subr.mxu0 0.0
    %500 = vmatpush1.msra.mxu0 0.0
    %501 = vmatprep.subr.mxu0 0.0
    %502 = vmatpush1.msra.mxu0 0.0
    %503 = vmatprep.subr.mxu0 0.0
    %504 = vmatpush1.msra.mxu0 0.0
    %505 = vmatprep.subr.mxu0 0.0
    %506 = vmatpush1.msra.mxu0 0.0
    %507 = vmatprep.subr.mxu0 0.0
    %508 = vmatpush1.msra.mxu0 0.0
    %509 = vmatprep.subr.mxu0 0.0
    %510 = vmatpush1.msra.mxu0 0.0
    %511 = vmatprep.subr.mxu0 0.0
    %512 = vmatpush1.msra.mxu0 0.0
    %513 = vmatprep.subr.mxu0 0.0
    %514 = vmatpush1.msra.mxu0 0.0
    %515 = vmatprep.subr.mxu0 0.0
    %516 = vmatpush1.msra.mxu0 0.0
    %517 = vmatprep.subr.mxu0 0.0
    %518 = vmatpush1.msra.mxu0 0.0
    %519 = vmatprep.subr.mxu0 0.0
    %520 = vmatpush1.msra.mxu0 0.0
    %521 = vmatprep.mubr.f32.mxu0 0.0
    %522 = vmatmul.mubr.f32.gmra.mrb[0].mxu0 %v431
    %v523 = vpop.f32.mrb[0].mxu0
    %v524 = vadd.f32 %v455, %v523
    %v525 = vpop.f32.mrb[0].mxu0
    %526 = vdwg.mxu0
    %v527 = vmul.f32 %v524, 0.2
    %v528 = vmax.f32 %v524, %v527
    %s529 = scalar_lea.vmem [#allocation7], 512
    %v530 = vld [vmem:[%s529] sm:$0xff]
    %v531 = vld [vmem:[%s529 + $0x8] sm:$0xff]
    %v532 = vld [vmem:[%s529 + $0x10] sm:$0xff]
    %v533 = vld [vmem:[%s529 + $0x18] sm:$0xff]
    %v534 = vld [vmem:[%s529 + $0x20] sm:$0xff]
    %v535 = vld [vmem:[%s529 + $0x28] sm:$0xff]
    %v536 = vld [vmem:[%s529 + $0x30] sm:$0xff]
    %v537 = vld [vmem:[%s529 + $0x38] sm:$0xff]
    %v538 = vld [vmem:[%s529 + $0x40] sm:$0xff]
    %v539 = vld [vmem:[%s529 + $0x48] sm:$0xff]
    %v540 = vld [vmem:[%s529 + $0x50] sm:$0xff]
    %v541 = vld [vmem:[%s529 + $0x58] sm:$0xff]
    %v542 = vld [vmem:[%s529 + $0x60] sm:$0xff]
    %v543 = vld [vmem:[%s529 + $0x68] sm:$0xff]
    %v544 = vld [vmem:[%s529 + $0x70] sm:$0xff]
    %v545 = vld [vmem:[%s529 + $0x78] sm:$0xff]
    %s546 = scalar_lea.vmem %s4, 4
    %v547 = vld [vmem:[%s546] sm:$0x1]
    %v549 = vlaneseq
    %v550 = vshrl.u32 %v549, 7
    %v551 = vsub.s32 0, %v550
    %v552 = vrot.slane %v547, %v551
    %554 = vmatprep.subr.mxu0 0.0
    %555 = vmatpush1.msra.mxu0 %v530
    %556 = vmatprep.subr.mxu0 0.0
    %557 = vmatpush1.msra.mxu0 %v531
    %558 = vmatprep.subr.mxu0 0.0
    %559 = vmatpush1.msra.mxu0 %v532
    %560 = vmatprep.subr.mxu0 0.0
    %561 = vmatpush1.msra.mxu0 %v533
    %562 = vmatprep.subr.mxu0 0.0
    %563 = vmatpush1.msra.mxu0 %v534
    %564 = vmatprep.subr.mxu0 0.0
    %565 = vmatpush1.msra.mxu0 %v535
    %566 = vmatprep.subr.mxu0 0.0
    %567 = vmatpush1.msra.mxu0 %v536
    %568 = vmatprep.subr.mxu0 0.0
    %569 = vmatpush1.msra.mxu0 %v537
    %570 = vmatprep.subr.mxu0 0.0
    %571 = vmatpush1.msra.mxu0 %v538
    %572 = vmatprep.subr.mxu0 0.0
    %573 = vmatpush1.msra.mxu0 %v539
    %574 = vmatprep.subr.mxu0 0.0
    %575 = vmatpush1.msra.mxu0 %v540
    %576 = vmatprep.subr.mxu0 0.0
    %577 = vmatpush1.msra.mxu0 %v541
    %578 = vmatprep.subr.mxu0 0.0
    %579 = vmatpush1.msra.mxu0 %v542
    %580 = vmatprep.subr.mxu0 0.0
    %581 = vmatpush1.msra.mxu0 %v543
    %582 = vmatprep.subr.mxu0 0.0
    %583 = vmatpush1.msra.mxu0 %v544
    %584 = vmatprep.subr.mxu0 0.0
    %585 = vmatpush1.msra.mxu0 %v545
    %586 = vmatprep.subr.mxu0 0.0
    %587 = vmatpush1.msra.mxu0 0.0
    %588 = vmatprep.subr.mxu0 0.0
    %589 = vmatpush1.msra.mxu0 0.0
    %590 = vmatprep.subr.mxu0 0.0
    %591 = vmatpush1.msra.mxu0 0.0
    %592 = vmatprep.subr.mxu0 0.0
    %593 = vmatpush1.msra.mxu0 0.0
    %594 = vmatprep.subr.mxu0 0.0
    %595 = vmatpush1.msra.mxu0 0.0
    %596 = vmatprep.subr.mxu0 0.0
    %597 = vmatpush1.msra.mxu0 0.0
    %598 = vmatprep.subr.mxu0 0.0
    %599 = vmatpush1.msra.mxu0 0.0
    %600 = vmatprep.subr.mxu0 0.0
    %601 = vmatpush1.msra.mxu0 0.0
    %602 = vmatprep.subr.mxu0 0.0
    %603 = vmatpush1.msra.mxu0 0.0
    %604 = vmatprep.subr.mxu0 0.0
    %605 = vmatpush1.msra.mxu0 0.0
    %606 = vmatprep.subr.mxu0 0.0
    %607 = vmatpush1.msra.mxu0 0.0
    %608 = vmatprep.subr.mxu0 0.0
    %609 = vmatpush1.msra.mxu0 0.0
    %610 = vmatprep.subr.mxu0 0.0
    %611 = vmatpush1.msra.mxu0 0.0
    %612 = vmatprep.subr.mxu0 0.0
    %613 = vmatpush1.msra.mxu0 0.0
    %614 = vmatprep.subr.mxu0 0.0
    %615 = vmatpush1.msra.mxu0 0.0
    %616 = vmatprep.subr.mxu0 0.0
    %617 = vmatpush1.msra.mxu0 0.0
    %618 = vmatprep.mubr.f32.mxu0 0.0
    %619 = vmatmul.mubr.f32.gmra.mrb[0].mxu0 %v528
    %v620 = vpop.f32.mrb[0].mxu0
    %v621 = vadd.f32 %v552, %v620
    %v622 = vpop.f32.mrb[0].mxu0
    %623 = vdwg.mxu0
    %v624 = vmul.f32 %v621, 0.2
    %v625 = vmax.f32 %v621, %v624
    %s626 = scalar_lea.vmem [#allocation7], 640
    %v627 = vld [vmem:[%s626] sm:$0xff]
    %v628 = vld [vmem:[%s626 + $0x8] sm:$0xff]
    %v629 = vld [vmem:[%s626 + $0x10] sm:$0xff]
    %v630 = vld [vmem:[%s626 + $0x18] sm:$0xff]
    %v631 = vld [vmem:[%s626 + $0x20] sm:$0xff]
    %v632 = vld [vmem:[%s626 + $0x28] sm:$0xff]
    %v633 = vld [vmem:[%s626 + $0x30] sm:$0xff]
    %v634 = vld [vmem:[%s626 + $0x38] sm:$0xff]
    %v635 = vld [vmem:[%s626 + $0x40] sm:$0xff]
    %v636 = vld [vmem:[%s626 + $0x48] sm:$0xff]
    %v637 = vld [vmem:[%s626 + $0x50] sm:$0xff]
    %v638 = vld [vmem:[%s626 + $0x58] sm:$0xff]
    %v639 = vld [vmem:[%s626 + $0x60] sm:$0xff]
    %v640 = vld [vmem:[%s626 + $0x68] sm:$0xff]
    %v641 = vld [vmem:[%s626 + $0x70] sm:$0xff]
    %v642 = vld [vmem:[%s626 + $0x78] sm:$0xff]
    %s643 = scalar_lea.vmem %s4, 5
    %v644 = vld [vmem:[%s643] sm:$0x1]
    %v646 = vlaneseq
    %v647 = vshrl.u32 %v646, 7
    %v648 = vsub.s32 0, %v647
    %v649 = vrot.slane %v644, %v648
    %651 = vmatprep.subr.mxu0 0.0
    %652 = vmatpush1.msra.mxu0 %v627
    %653 = vmatprep.subr.mxu0 0.0
    %654 = vmatpush1.msra.mxu0 %v628
    %655 = vmatprep.subr.mxu0 0.0
    %656 = vmatpush1.msra.mxu0 %v629
    %657 = vmatprep.subr.mxu0 0.0
    %658 = vmatpush1.msra.mxu0 %v630
    %659 = vmatprep.subr.mxu0 0.0
    %660 = vmatpush1.msra.mxu0 %v631
    %661 = vmatprep.subr.mxu0 0.0
    %662 = vmatpush1.msra.mxu0 %v632
    %663 = vmatprep.subr.mxu0 0.0
    %664 = vmatpush1.msra.mxu0 %v633
    %665 = vmatprep.subr.mxu0 0.0
    %666 = vmatpush1.msra.mxu0 %v634
    %667 = vmatprep.subr.mxu0 0.0
    %668 = vmatpush1.msra.mxu0 %v635
    %669 = vmatprep.subr.mxu0 0.0
    %670 = vmatpush1.msra.mxu0 %v636
    %671 = vmatprep.subr.mxu0 0.0
    %672 = vmatpush1.msra.mxu0 %v637
    %673 = vmatprep.subr.mxu0 0.0
    %674 = vmatpush1.msra.mxu0 %v638
    %675 = vmatprep.subr.mxu0 0.0
    %676 = vmatpush1.msra.mxu0 %v639
    %677 = vmatprep.subr.mxu0 0.0
    %678 = vmatpush1.msra.mxu0 %v640
    %679 = vmatprep.subr.mxu0 0.0
    %680 = vmatpush1.msra.mxu0 %v641
    %681 = vmatprep.subr.mxu0 0.0
    %682 = vmatpush1.msra.mxu0 %v642
    %683 = vmatprep.subr.mxu0 0.0
    %684 = vmatpush1.msra.mxu0 0.0
    %685 = vmatprep.subr.mxu0 0.0
    %686 = vmatpush1.msra.mxu0 0.0
    %687 = vmatprep.subr.mxu0 0.0
    %688 = vmatpush1.msra.mxu0 0.0
    %689 = vmatprep.subr.mxu0 0.0
    %690 = vmatpush1.msra.mxu0 0.0
    %691 = vmatprep.subr.mxu0 0.0
    %692 = vmatpush1.msra.mxu0 0.0
    %693 = vmatprep.subr.mxu0 0.0
    %694 = vmatpush1.msra.mxu0 0.0
    %695 = vmatprep.subr.mxu0 0.0
    %696 = vmatpush1.msra.mxu0 0.0
    %697 = vmatprep.subr.mxu0 0.0
    %698 = vmatpush1.msra.mxu0 0.0
    %699 = vmatprep.subr.mxu0 0.0
    %700 = vmatpush1.msra.mxu0 0.0
    %701 = vmatprep.subr.mxu0 0.0
    %702 = vmatpush1.msra.mxu0 0.0
    %703 = vmatprep.subr.mxu0 0.0
    %704 = vmatpush1.msra.mxu0 0.0
    %705 = vmatprep.subr.mxu0 0.0
    %706 = vmatpush1.msra.mxu0 0.0
    %707 = vmatprep.subr.mxu0 0.0
    %708 = vmatpush1.msra.mxu0 0.0
    %709 = vmatprep.subr.mxu0 0.0
    %710 = vmatpush1.msra.mxu0 0.0
    %711 = vmatprep.subr.mxu0 0.0
    %712 = vmatpush1.msra.mxu0 0.0
    %713 = vmatprep.subr.mxu0 0.0
    %714 = vmatpush1.msra.mxu0 0.0
    %715 = vmatprep.mubr.f32.mxu0 0.0
    %716 = vmatmul.mubr.f32.gmra.mrb[0].mxu0 %v625
    %v717 = vpop.f32.mrb[0].mxu0
    %v718 = vadd.f32 %v649, %v717
    %v719 = vpop.f32.mrb[0].mxu0
    %720 = vdwg.mxu0
    %v721 = vmul.f32 %v718, 0.2
    %v722 = vmax.f32 %v718, %v721
    %v723 = vadd.f32 %v431, %v722
    %v724 = vmul.f32 %v723, 0.70710677
    %725 = vst [vmem:[#allocation8] sm:$0xff] %v724
    // Predicated region
    $region34: #{tpu_custom_call.1} parent=1 // pred_check
      _
    $region35: #{tpu_custom_call.1} parent=1 // pred_check_branch
      %727 = sbr.rel (0) target = $region37
    $region36: #{tpu_custom_call.1} parent=1 // pred_region
      %s729 = ssub.s32 128, 128
      %730 = vsyncadd [#allocation4], %s729
      %s732 = sshll.u32 [#allocation8], 4
      %s733 = int_to_ptr.vmem [resolvable:$true] %s732
      %735 = dma.vmem_to_hbm [thread:$0]  %s733, 128, %s5, [#allocation4]
    $region37: #{tpu_custom_call.1} parent=1 // pred_fallthru
      _
    // Predicated region
    $region38: #{tpu_custom_call.1} parent=1 // pred_check
      _
    $region39: #{tpu_custom_call.1} parent=1 // pred_check_branch
      %737 = sbr.rel (0) target = $region41
    $region40: #{tpu_custom_call.1} parent=1 // pred_region
      %738 = dma.done [#allocation4], 128
    $region41: #{tpu_custom_call.1} parent=1 // pred_fallthru
      _
    %739 = vsyncpa [#allocation3], 1
    %740 = vsyncpa [#allocation6], 1
    %741 = vsyncpa [#allocation4], 1

// kernel: tpu_custom_call.1
$region0: #{tpu_custom_call.1}
  #allocation0 [shape = 'u32[]', space=smem, size = 0x4, offset = 0x4, fixed_abs, tag = 'smem constant byte address 0x4 - core index']
  #allocation1 [shape = 'u32[144,128]{1,0:T(1,128)}', space=vmem, size = 0x12000, scoped, tag = 'internal scratch']
  %s0 = inlined_call_operand.hbm [shape: f32[8,8], index: 0, kind: input, shape index: {}]
  %s1 = inlined_call_operand.hbm [shape: f32[8,128], index: 1, kind: input, shape index: {}]
  %s2 = inlined_call_operand.vmem [shape: f32[1,128], index: 2, kind: input, shape index: {}]
  %s3 = inlined_call_operand.hbm [shape: f32[6,128,128], index: 3, kind: input, shape index: {}]
  %s4 = inlined_call_operand.vmem [shape: f32[6,1,128], index: 4, kind: input, shape index: {}]
  %s5 = inlined_call_operand.hbm [shape: f32[8,128], index: 5, kind: output, shape index: {}]
  %s6 = sld [smem:[#allocation0]]
  $region42: #{tpu_custom_call.1} parent=0
    _
  %s8 = ssub.s32 1, %s6
  %s9 = scalar_select 0, %s8, %s6
  $region1: #{tpu_custom_call.1} parent=0
    #allocation2 [shape = 'u8[4096]{0}', space=vmem, size = 0x1000, scoped, tag = 'input window, operand 0, single buffered']
    #allocation3 [shape = 's32[1]{0}', space=sflag, size = 0x4, scoped, tag = 'scoped memory for tpu_custom_call.1']
    #allocation4 [shape = 's32[1]{0}', space=sflag, size = 0x4, scoped, tag = 'scoped memory for tpu_custom_call.1']
    #allocation5 [shape = 'u8[4096]{0}', space=vmem, size = 0x1000, scoped, tag = 'input window, operand 1, single buffered']
    #allocation6 [shape = 's32[1]{0}', space=sflag, size = 0x4, scoped, tag = 'scoped memory for tpu_custom_call.1']
    #allocation7 [shape = 'u8[393216]{0}', space=vmem, size = 0x60000, scoped, tag = 'input window, operand 3, single buffered']
    #allocation8 [shape = 'u8[4096]{0}', space=vmem, size = 0x1000, scoped, tag = 'output window, operand 0, single buffered']
    %10 = vsyncpa [#allocation3], 0
    %11 = vsyncpa [#allocation6], 0
    %12 = vsyncpa [#allocation4], 0
    // Predicated region
    $region2: #{tpu_custom_call.1} parent=1 // pred_check
      _
    $region3: #{tpu_custom_call.1} parent=1 // pred_check_branch
      %14 = sbr.rel (0) target = $region5
    $region4: #{tpu_custom_call.1} parent=1 // pred_region
      %s16 = ssub.s32 128, 128
      %17 = vsyncadd [#allocation3], %s16
      %s19 = sshll.u32 [#allocation2], 4
      %s20 = int_to_ptr.vmem [resolvable:$true] %s19
      %22 = dma.hbm_to_vmem [thread:$0]  %s0, 128, %s20, [#allocation3]
    $region5: #{tpu_custom_call.1} parent=1 // pred_fallthru
      _
    // Predicated region
    $region6: #{tpu_custom_call.1} parent=1 // pred_check
      _
    $region7: #{tpu_custom_call.1} parent=1 // pred_check_branch
      %24 = sbr.rel (0) target = $region9
    $region8: #{tpu_custom_call.1} parent=1 // pred_region
      %s26 = ssub.s32 128, 128
      %27 = vsyncadd [#allocation6], %s26
      %s29 = sshll.u32 [#allocation5], 4
      %s30 = int_to_ptr.vmem [resolvable:$true] %s29
      %32 = dma.hbm_to_vmem [thread:$0]  %s1, 128, %s30, [#allocation6]
    $region9: #{tpu_custom_call.1} parent=1 // pred_fallthru
      _
    // Predicated region
    $region10: #{tpu_custom_call.1} parent=1 // pred_check
      _
    $region11: #{tpu_custom_call.1} parent=1 // pred_check_branch
      %34 = sbr.rel (0) target = $region13
    $region12: #{tpu_custom_call.1} parent=1 // pred_region
      _
    $region13: #{tpu_custom_call.1} parent=1 // pred_fallthru
      _
    // Predicated region
    $region14: #{tpu_custom_call.1} parent=1 // pred_check
      _
    $region15: #{tpu_custom_call.1} parent=1 // pred_check_branch
      %36 = sbr.rel (0) target = $region17
    $region16: #{tpu_custom_call.1} parent=1 // pred_region
      %s38 = ssub.s32 12288, 12288
      %39 = vsyncadd [#allocation6], %s38
      %s40 = sshll.u32 [#allocation7], 4
      %s41 = int_to_ptr.vmem [resolvable:$true] %s40
      %46 = dma.hbm_to_vmem [thread:$0]  %s3, 12288, %s41, [#allocation6], 128, 128, 8
    $region17: #{tpu_custom_call.1} parent=1 // pred_fallthru
      _
    // Predicated region
    $region18: #{tpu_custom_call.1} parent=1 // pred_check
      _
    $region19: #{tpu_custom_call.1} parent=1 // pred_check_branch
      %48 = sbr.rel (0) target = $region21
    $region20: #{tpu_custom_call.1} parent=1 // pred_region
      _
    $region21: #{tpu_custom_call.1} parent=1 // pred_fallthru
      _
    // Predicated region
    $region22: #{tpu_custom_call.1} parent=1 // pred_check
      _
    $region23: #{tpu_custom_call.1} parent=1 // pred_check_branch
      %50 = sbr.rel (0) target = $region25
    $region24: #{tpu_custom_call.1} parent=1 // pred_region
      %51 = dma.done [#allocation3], 128
    $region25: #{tpu_custom_call.1} parent=1 // pred_fallthru
      _
    // Predicated region
    $region26: #{tpu_custom_call.1} parent=1 // pred_check
      _
    $region27: #{tpu_custom_call.1} parent=1 // pred_check_branch
      %53 = sbr.rel (0) target = $region29
    $region28: #{tpu_custom_call.1} parent=1 // pred_region
      %54 = dma.done [#allocation6], 128
    $region29: #{tpu_custom_call.1} parent=1 // pred_fallthru
      _
    // Predicated region
    $region30: #{tpu_custom_call.1} parent=1 // pred_check
      _
    $region31: #{tpu_custom_call.1} parent=1 // pred_check_branch
      %56 = sbr.rel (0) target = $region33
    $region32: #{tpu_custom_call.1} parent=1 // pred_region
      %57 = dma.done [#allocation6], 12288
    $region33: #{tpu_custom_call.1} parent=1 // pred_fallthru
      _
    %v58 = vld [vmem:[#allocation2] sm:$0xff]
    %v59 = vld [vmem:[#allocation5] sm:$0xff]
    %v60 = vld [vmem:[%s2] sm:$0x1]
    %v62 = vlaneseq
    %v63 = vshrl.u32 %v62, 7
    %v64 = vsub.s32 0, %v63
    %v65 = vrot.slane %v60, %v64
    %vm67 = vcmask 64512
    %v69 = vsel %vm67, %v58, 0
    %71 = vmatprep.subr.mxu0 0.0
    %72 = vmatpush1.msra.mxu0 %v59
    %73 = vmatprep.subr.mxu0 0.0
    %74 = vmatpush1.msra.mxu0 0.0
    %75 = vmatprep.subr.mxu0 0.0
    %76 = vmatpush1.msra.mxu0 0.0
    %77 = vmatprep.subr.mxu0 0.0
    %78 = vmatpush1.msra.mxu0 0.0
    %79 = vmatprep.subr.mxu0 0.0
    %80 = vmatpush1.msra.mxu0 0.0
    %81 = vmatprep.subr.mxu0 0.0
    %82 = vmatpush1.msra.mxu0 0.0
    %83 = vmatprep.subr.mxu0 0.0
    %84 = vmatpush1.msra.mxu0 0.0
    %85 = vmatprep.subr.mxu0 0.0
    %86 = vmatpush1.msra.mxu0 0.0
    %87 = vmatprep.subr.mxu0 0.0
    %88 = vmatpush1.msra.mxu0 0.0
    %89 = vmatprep.subr.mxu0 0.0
    %90 = vmatpush1.msra.mxu0 0.0
    %91 = vmatprep.subr.mxu0 0.0
    %92 = vmatpush1.msra.mxu0 0.0
    %93 = vmatprep.subr.mxu0 0.0
    %94 = vmatpush1.msra.mxu0 0.0
    %95 = vmatprep.subr.mxu0 0.0
    %96 = vmatpush1.msra.mxu0 0.0
    %97 = vmatprep.subr.mxu0 0.0
    %98 = vmatpush1.msra.mxu0 0.0
    %99 = vmatprep.subr.mxu0 0.0
    %100 = vmatpush1.msra.mxu0 0.0
    %101 = vmatprep.subr.mxu0 0.0
    %102 = vmatpush1.msra.mxu0 0.0
    %103 = vmatprep.subr.mxu0 0.0
    %104 = vmatpush1.msra.mxu0 0.0
    %105 = vmatprep.subr.mxu0 0.0
    %106 = vmatpush1.msra.mxu0 0.0
    %107 = vmatprep.subr.mxu0 0.0
    %108 = vmatpush1.msra.mxu0 0.0
    %109 = vmatprep.subr.mxu0 0.0
    %110 = vmatpush1.msra.mxu0 0.0
    %111 = vmatprep.subr.mxu0 0.0
    %112 = vmatpush1.msra.mxu0 0.0
    %113 = vmatprep.subr.mxu0 0.0
    %114 = vmatpush1.msra.mxu0 0.0
    %115 = vmatprep.subr.mxu0 0.0
    %116 = vmatpush1.msra.mxu0 0.0
    %117 = vmatprep.subr.mxu0 0.0
    %118 = vmatpush1.msra.mxu0 0.0
    %119 = vmatprep.subr.mxu0 0.0
    %120 = vmatpush1.msra.mxu0 0.0
    %121 = vmatprep.subr.mxu0 0.0
    %122 = vmatpush1.msra.mxu0 0.0
    %123 = vmatprep.subr.mxu0 0.0
    %124 = vmatpush1.msra.mxu0 0.0
    %125 = vmatprep.subr.mxu0 0.0
    %126 = vmatpush1.msra.mxu0 0.0
    %127 = vmatprep.subr.mxu0 0.0
    %128 = vmatpush1.msra.mxu0 0.0
    %129 = vmatprep.subr.mxu0 0.0
    %130 = vmatpush1.msra.mxu0 0.0
    %131 = vmatprep.subr.mxu0 0.0
    %132 = vmatpush1.msra.mxu0 0.0
    %133 = vmatprep.subr.mxu0 0.0
    %134 = vmatpush1.msra.mxu0 0.0
    %135 = vmatprep.mubr.f32.mxu0 0.0
    %136 = vmatmul.mubr.f32.gmra.mrb[0].mxu0 %v69
    %v137 = vpop.f32.mrb[0].mxu0
    %v138 = vadd.f32 %v65, %v137
    %v139 = vpop.f32.mrb[0].mxu0
    %140 = vdwg.mxu0
    %v141 = vld [vmem:[#allocation7] sm:$0xff]
    %v142 = vld [vmem:[#allocation7 + $0x8] sm:$0xff]
    %v143 = vld [vmem:[#allocation7 + $0x10] sm:$0xff]
    %v144 = vld [vmem:[#allocation7 + $0x18] sm:$0xff]
    %v145 = vld [vmem:[#allocation7 + $0x20] sm:$0xff]
    %v146 = vld [vmem:[#allocation7 + $0x28] sm:$0xff]
    %v147 = vld [vmem:[#allocation7 + $0x30] sm:$0xff]
    %v148 = vld [vmem:[#allocation7 + $0x38] sm:$0xff]
    %v149 = vld [vmem:[#allocation7 + $0x40] sm:$0xff]
    %v150 = vld [vmem:[#allocation7 + $0x48] sm:$0xff]
    %v151 = vld [vmem:[#allocation7 + $0x50] sm:$0xff]
    %v152 = vld [vmem:[#allocation7 + $0x58] sm:$0xff]
    %v153 = vld [vmem:[#allocation7 + $0x60] sm:$0xff]
    %v154 = vld [vmem:[#allocation7 + $0x68] sm:$0xff]
    %v155 = vld [vmem:[#allocation7 + $0x70] sm:$0xff]
    %v156 = vld [vmem:[#allocation7 + $0x78] sm:$0xff]
    %v157 = vld [vmem:[%s4] sm:$0x1]
    %v159 = vlaneseq
    %v160 = vshrl.u32 %v159, 7
    %v161 = vsub.s32 0, %v160
    %v162 = vrot.slane %v157, %v161
    %164 = vmatprep.subr.mxu0 0.0
    %165 = vmatpush1.msra.mxu0 %v141
    %166 = vmatprep.subr.mxu0 0.0
    %167 = vmatpush1.msra.mxu0 %v142
    %168 = vmatprep.subr.mxu0 0.0
    %169 = vmatpush1.msra.mxu0 %v143
    %170 = vmatprep.subr.mxu0 0.0
    %171 = vmatpush1.msra.mxu0 %v144
    %172 = vmatprep.subr.mxu0 0.0
    %173 = vmatpush1.msra.mxu0 %v145
    %174 = vmatprep.subr.mxu0 0.0
    %175 = vmatpush1.msra.mxu0 %v146
    %176 = vmatprep.subr.mxu0 0.0
    %177 = vmatpush1.msra.mxu0 %v147
    %178 = vmatprep.subr.mxu0 0.0
    %179 = vmatpush1.msra.mxu0 %v148
    %180 = vmatprep.subr.mxu0 0.0
    %181 = vmatpush1.msra.mxu0 %v149
    %182 = vmatprep.subr.mxu0 0.0
    %183 = vmatpush1.msra.mxu0 %v150
    %184 = vmatprep.subr.mxu0 0.0
    %185 = vmatpush1.msra.mxu0 %v151
    %186 = vmatprep.subr.mxu0 0.0
    %187 = vmatpush1.msra.mxu0 %v152
    %188 = vmatprep.subr.mxu0 0.0
    %189 = vmatpush1.msra.mxu0 %v153
    %190 = vmatprep.subr.mxu0 0.0
    %191 = vmatpush1.msra.mxu0 %v154
    %192 = vmatprep.subr.mxu0 0.0
    %193 = vmatpush1.msra.mxu0 %v155
    %194 = vmatprep.subr.mxu0 0.0
    %195 = vmatpush1.msra.mxu0 %v156
    %196 = vmatprep.subr.mxu0 0.0
    %197 = vmatpush1.msra.mxu0 0.0
    %198 = vmatprep.subr.mxu0 0.0
    %199 = vmatpush1.msra.mxu0 0.0
    %200 = vmatprep.subr.mxu0 0.0
    %201 = vmatpush1.msra.mxu0 0.0
    %202 = vmatprep.subr.mxu0 0.0
    %203 = vmatpush1.msra.mxu0 0.0
    %204 = vmatprep.subr.mxu0 0.0
    %205 = vmatpush1.msra.mxu0 0.0
    %206 = vmatprep.subr.mxu0 0.0
    %207 = vmatpush1.msra.mxu0 0.0
    %208 = vmatprep.subr.mxu0 0.0
    %209 = vmatpush1.msra.mxu0 0.0
    %210 = vmatprep.subr.mxu0 0.0
    %211 = vmatpush1.msra.mxu0 0.0
    %212 = vmatprep.subr.mxu0 0.0
    %213 = vmatpush1.msra.mxu0 0.0
    %214 = vmatprep.subr.mxu0 0.0
    %215 = vmatpush1.msra.mxu0 0.0
    %216 = vmatprep.subr.mxu0 0.0
    %217 = vmatpush1.msra.mxu0 0.0
    %218 = vmatprep.subr.mxu0 0.0
    %219 = vmatpush1.msra.mxu0 0.0
    %220 = vmatprep.subr.mxu0 0.0
    %221 = vmatpush1.msra.mxu0 0.0
    %222 = vmatprep.subr.mxu0 0.0
    %223 = vmatpush1.msra.mxu0 0.0
    %224 = vmatprep.subr.mxu0 0.0
    %225 = vmatpush1.msra.mxu0 0.0
    %226 = vmatprep.subr.mxu0 0.0
    %227 = vmatpush1.msra.mxu0 0.0
    %228 = vmatprep.mubr.f32.mxu0 0.0
    %229 = vmatmul.mubr.f32.gmra.mrb[0].mxu0 %v138
    %v230 = vpop.f32.mrb[0].mxu0
    %v231 = vadd.f32 %v162, %v230
    %v232 = vpop.f32.mrb[0].mxu0
    %233 = vdwg.mxu0
    %v234 = vmul.f32 %v231, 0.2
    %v235 = vmax.f32 %v231, %v234
    %s236 = scalar_lea.vmem [#allocation7], 128
    %v237 = vld [vmem:[%s236] sm:$0xff]
    %v238 = vld [vmem:[%s236 + $0x8] sm:$0xff]
    %v239 = vld [vmem:[%s236 + $0x10] sm:$0xff]
    %v240 = vld [vmem:[%s236 + $0x18] sm:$0xff]
    %v241 = vld [vmem:[%s236 + $0x20] sm:$0xff]
    %v242 = vld [vmem:[%s236 + $0x28] sm:$0xff]
    %v243 = vld [vmem:[%s236 + $0x30] sm:$0xff]
    %v244 = vld [vmem:[%s236 + $0x38] sm:$0xff]
    %v245 = vld [vmem:[%s236 + $0x40] sm:$0xff]
    %v246 = vld [vmem:[%s236 + $0x48] sm:$0xff]
    %v247 = vld [vmem:[%s236 + $0x50] sm:$0xff]
    %v248 = vld [vmem:[%s236 + $0x58] sm:$0xff]
    %v249 = vld [vmem:[%s236 + $0x60] sm:$0xff]
    %v250 = vld [vmem:[%s236 + $0x68] sm:$0xff]
    %v251 = vld [vmem:[%s236 + $0x70] sm:$0xff]
    %v252 = vld [vmem:[%s236 + $0x78] sm:$0xff]
    %s253 = scalar_lea.vmem %s4, 1
    %v254 = vld [vmem:[%s253] sm:$0x1]
    %v256 = vlaneseq
    %v257 = vshrl.u32 %v256, 7
    %v258 = vsub.s32 0, %v257
    %v259 = vrot.slane %v254, %v258
    %261 = vmatprep.subr.mxu0 0.0
    %262 = vmatpush1.msra.mxu0 %v237
    %263 = vmatprep.subr.mxu0 0.0
    %264 = vmatpush1.msra.mxu0 %v238
    %265 = vmatprep.subr.mxu0 0.0
    %266 = vmatpush1.msra.mxu0 %v239
    %267 = vmatprep.subr.mxu0 0.0
    %268 = vmatpush1.msra.mxu0 %v240
    %269 = vmatprep.subr.mxu0 0.0
    %270 = vmatpush1.msra.mxu0 %v241
    %271 = vmatprep.subr.mxu0 0.0
    %272 = vmatpush1.msra.mxu0 %v242
    %273 = vmatprep.subr.mxu0 0.0
    %274 = vmatpush1.msra.mxu0 %v243
    %275 = vmatprep.subr.mxu0 0.0
    %276 = vmatpush1.msra.mxu0 %v244
    %277 = vmatprep.subr.mxu0 0.0
    %278 = vmatpush1.msra.mxu0 %v245
    %279 = vmatprep.subr.mxu0 0.0
    %280 = vmatpush1.msra.mxu0 %v246
    %281 = vmatprep.subr.mxu0 0.0
    %282 = vmatpush1.msra.mxu0 %v247
    %283 = vmatprep.subr.mxu0 0.0
    %284 = vmatpush1.msra.mxu0 %v248
    %285 = vmatprep.subr.mxu0 0.0
    %286 = vmatpush1.msra.mxu0 %v249
    %287 = vmatprep.subr.mxu0 0.0
    %288 = vmatpush1.msra.mxu0 %v250
    %289 = vmatprep.subr.mxu0 0.0
    %290 = vmatpush1.msra.mxu0 %v251
    %291 = vmatprep.subr.mxu0 0.0
    %292 = vmatpush1.msra.mxu0 %v252
    %293 = vmatprep.subr.mxu0 0.0
    %294 = vmatpush1.msra.mxu0 0.0
    %295 = vmatprep.subr.mxu0 0.0
    %296 = vmatpush1.msra.mxu0 0.0
    %297 = vmatprep.subr.mxu0 0.0
    %298 = vmatpush1.msra.mxu0 0.0
    %299 = vmatprep.subr.mxu0 0.0
    %300 = vmatpush1.msra.mxu0 0.0
    %301 = vmatprep.subr.mxu0 0.0
    %302 = vmatpush1.msra.mxu0 0.0
    %303 = vmatprep.subr.mxu0 0.0
    %304 = vmatpush1.msra.mxu0 0.0
    %305 = vmatprep.subr.mxu0 0.0
    %306 = vmatpush1.msra.mxu0 0.0
    %307 = vmatprep.subr.mxu0 0.0
    %308 = vmatpush1.msra.mxu0 0.0
    %309 = vmatprep.subr.mxu0 0.0
    %310 = vmatpush1.msra.mxu0 0.0
    %311 = vmatprep.subr.mxu0 0.0
    %312 = vmatpush1.msra.mxu0 0.0
    %313 = vmatprep.subr.mxu0 0.0
    %314 = vmatpush1.msra.mxu0 0.0
    %315 = vmatprep.subr.mxu0 0.0
    %316 = vmatpush1.msra.mxu0 0.0
    %317 = vmatprep.subr.mxu0 0.0
    %318 = vmatpush1.msra.mxu0 0.0
    %319 = vmatprep.subr.mxu0 0.0
    %320 = vmatpush1.msra.mxu0 0.0
    %321 = vmatprep.subr.mxu0 0.0
    %322 = vmatpush1.msra.mxu0 0.0
    %323 = vmatprep.subr.mxu0 0.0
    %324 = vmatpush1.msra.mxu0 0.0
    %325 = vmatprep.mubr.f32.mxu0 0.0
    %326 = vmatmul.mubr.f32.gmra.mrb[0].mxu0 %v235
    %v327 = vpop.f32.mrb[0].mxu0
    %v328 = vadd.f32 %v259, %v327
    %v329 = vpop.f32.mrb[0].mxu0
    %330 = vdwg.mxu0
    %v331 = vmul.f32 %v328, 0.2
    %v332 = vmax.f32 %v328, %v331
    %s333 = scalar_lea.vmem [#allocation7], 256
    %v334 = vld [vmem:[%s333] sm:$0xff]
    %v335 = vld [vmem:[%s333 + $0x8] sm:$0xff]
    %v336 = vld [vmem:[%s333 + $0x10] sm:$0xff]
    %v337 = vld [vmem:[%s333 + $0x18] sm:$0xff]
    %v338 = vld [vmem:[%s333 + $0x20] sm:$0xff]
    %v339 = vld [vmem:[%s333 + $0x28] sm:$0xff]
    %v340 = vld [vmem:[%s333 + $0x30] sm:$0xff]
    %v341 = vld [vmem:[%s333 + $0x38] sm:$0xff]
    %v342 = vld [vmem:[%s333 + $0x40] sm:$0xff]
    %v343 = vld [vmem:[%s333 + $0x48] sm:$0xff]
    %v344 = vld [vmem:[%s333 + $0x50] sm:$0xff]
    %v345 = vld [vmem:[%s333 + $0x58] sm:$0xff]
    %v346 = vld [vmem:[%s333 + $0x60] sm:$0xff]
    %v347 = vld [vmem:[%s333 + $0x68] sm:$0xff]
    %v348 = vld [vmem:[%s333 + $0x70] sm:$0xff]
    %v349 = vld [vmem:[%s333 + $0x78] sm:$0xff]
    %s350 = scalar_lea.vmem %s4, 2
    %v351 = vld [vmem:[%s350] sm:$0x1]
    %v353 = vlaneseq
    %v354 = vshrl.u32 %v353, 7
    %v355 = vsub.s32 0, %v354
    %v356 = vrot.slane %v351, %v355
    %358 = vmatprep.subr.mxu0 0.0
    %359 = vmatpush1.msra.mxu0 %v334
    %360 = vmatprep.subr.mxu0 0.0
    %361 = vmatpush1.msra.mxu0 %v335
    %362 = vmatprep.subr.mxu0 0.0
    %363 = vmatpush1.msra.mxu0 %v336
    %364 = vmatprep.subr.mxu0 0.0
    %365 = vmatpush1.msra.mxu0 %v337
    %366 = vmatprep.subr.mxu0 0.0
    %367 = vmatpush1.msra.mxu0 %v338
    %368 = vmatprep.subr.mxu0 0.0
    %369 = vmatpush1.msra.mxu0 %v339
    %370 = vmatprep.subr.mxu0 0.0
    %371 = vmatpush1.msra.mxu0 %v340
    %372 = vmatprep.subr.mxu0 0.0
    %373 = vmatpush1.msra.mxu0 %v341
    %374 = vmatprep.subr.mxu0 0.0
    %375 = vmatpush1.msra.mxu0 %v342
    %376 = vmatprep.subr.mxu0 0.0
    %377 = vmatpush1.msra.mxu0 %v343
    %378 = vmatprep.subr.mxu0 0.0
    %379 = vmatpush1.msra.mxu0 %v344
    %380 = vmatprep.subr.mxu0 0.0
    %381 = vmatpush1.msra.mxu0 %v345
    %382 = vmatprep.subr.mxu0 0.0
    %383 = vmatpush1.msra.mxu0 %v346
    %384 = vmatprep.subr.mxu0 0.0
    %385 = vmatpush1.msra.mxu0 %v347
    %386 = vmatprep.subr.mxu0 0.0
    %387 = vmatpush1.msra.mxu0 %v348
    %388 = vmatprep.subr.mxu0 0.0
    %389 = vmatpush1.msra.mxu0 %v349
    %390 = vmatprep.subr.mxu0 0.0
    %391 = vmatpush1.msra.mxu0 0.0
    %392 = vmatprep.subr.mxu0 0.0
    %393 = vmatpush1.msra.mxu0 0.0
    %394 = vmatprep.subr.mxu0 0.0
    %395 = vmatpush1.msra.mxu0 0.0
    %396 = vmatprep.subr.mxu0 0.0
    %397 = vmatpush1.msra.mxu0 0.0
    %398 = vmatprep.subr.mxu0 0.0
    %399 = vmatpush1.msra.mxu0 0.0
    %400 = vmatprep.subr.mxu0 0.0
    %401 = vmatpush1.msra.mxu0 0.0
    %402 = vmatprep.subr.mxu0 0.0
    %403 = vmatpush1.msra.mxu0 0.0
    %404 = vmatprep.subr.mxu0 0.0
    %405 = vmatpush1.msra.mxu0 0.0
    %406 = vmatprep.subr.mxu0 0.0
    %407 = vmatpush1.msra.mxu0 0.0
    %408 = vmatprep.subr.mxu0 0.0
    %409 = vmatpush1.msra.mxu0 0.0
    %410 = vmatprep.subr.mxu0 0.0
    %411 = vmatpush1.msra.mxu0 0.0
    %412 = vmatprep.subr.mxu0 0.0
    %413 = vmatpush1.msra.mxu0 0.0
    %414 = vmatprep.subr.mxu0 0.0
    %415 = vmatpush1.msra.mxu0 0.0
    %416 = vmatprep.subr.mxu0 0.0
    %417 = vmatpush1.msra.mxu0 0.0
    %418 = vmatprep.subr.mxu0 0.0
    %419 = vmatpush1.msra.mxu0 0.0
    %420 = vmatprep.subr.mxu0 0.0
    %421 = vmatpush1.msra.mxu0 0.0
    %422 = vmatprep.mubr.f32.mxu0 0.0
    %423 = vmatmul.mubr.f32.gmra.mrb[0].mxu0 %v332
    %v424 = vpop.f32.mrb[0].mxu0
    %v425 = vadd.f32 %v356, %v424
    %v426 = vpop.f32.mrb[0].mxu0
    %427 = vdwg.mxu0
    %v428 = vmul.f32 %v425, 0.2
    %v429 = vmax.f32 %v425, %v428
    %v430 = vadd.f32 %v138, %v429
    %v431 = vmul.f32 %v430, 0.70710677
    %s432 = scalar_lea.vmem [#allocation7], 384
    %v433 = vld [vmem:[%s432] sm:$0xff]
    %v434 = vld [vmem:[%s432 + $0x8] sm:$0xff]
    %v435 = vld [vmem:[%s432 + $0x10] sm:$0xff]
    %v436 = vld [vmem:[%s432 + $0x18] sm:$0xff]
    %v437 = vld [vmem:[%s432 + $0x20] sm:$0xff]
    %v438 = vld [vmem:[%s432 + $0x28] sm:$0xff]
    %v439 = vld [vmem:[%s432 + $0x30] sm:$0xff]
    %v440 = vld [vmem:[%s432 + $0x38] sm:$0xff]
    %v441 = vld [vmem:[%s432 + $0x40] sm:$0xff]
    %v442 = vld [vmem:[%s432 + $0x48] sm:$0xff]
    %v443 = vld [vmem:[%s432 + $0x50] sm:$0xff]
    %v444 = vld [vmem:[%s432 + $0x58] sm:$0xff]
    %v445 = vld [vmem:[%s432 + $0x60] sm:$0xff]
    %v446 = vld [vmem:[%s432 + $0x68] sm:$0xff]
    %v447 = vld [vmem:[%s432 + $0x70] sm:$0xff]
    %v448 = vld [vmem:[%s432 + $0x78] sm:$0xff]
    %s449 = scalar_lea.vmem %s4, 3
    %v450 = vld [vmem:[%s449] sm:$0x1]
    %v452 = vlaneseq
    %v453 = vshrl.u32 %v452, 7
    %v454 = vsub.s32 0, %v453
    %v455 = vrot.slane %v450, %v454
    %457 = vmatprep.subr.mxu0 0.0
    %458 = vmatpush1.msra.mxu0 %v433
    %459 = vmatprep.subr.mxu0 0.0
    %460 = vmatpush1.msra.mxu0 %v434
    %461 = vmatprep.subr.mxu0 0.0
    %462 = vmatpush1.msra.mxu0 %v435
    %463 = vmatprep.subr.mxu0 0.0
    %464 = vmatpush1.msra.mxu0 %v436
    %465 = vmatprep.subr.mxu0 0.0
    %466 = vmatpush1.msra.mxu0 %v437
    %467 = vmatprep.subr.mxu0 0.0
    %468 = vmatpush1.msra.mxu0 %v438
    %469 = vmatprep.subr.mxu0 0.0
    %470 = vmatpush1.msra.mxu0 %v439
    %471 = vmatprep.subr.mxu0 0.0
    %472 = vmatpush1.msra.mxu0 %v440
    %473 = vmatprep.subr.mxu0 0.0
    %474 = vmatpush1.msra.mxu0 %v441
    %475 = vmatprep.subr.mxu0 0.0
    %476 = vmatpush1.msra.mxu0 %v442
    %477 = vmatprep.subr.mxu0 0.0
    %478 = vmatpush1.msra.mxu0 %v443
    %479 = vmatprep.subr.mxu0 0.0
    %480 = vmatpush1.msra.mxu0 %v444
    %481 = vmatprep.subr.mxu0 0.0
    %482 = vmatpush1.msra.mxu0 %v445
    %483 = vmatprep.subr.mxu0 0.0
    %484 = vmatpush1.msra.mxu0 %v446
    %485 = vmatprep.subr.mxu0 0.0
    %486 = vmatpush1.msra.mxu0 %v447
    %487 = vmatprep.subr.mxu0 0.0
    %488 = vmatpush1.msra.mxu0 %v448
    %489 = vmatprep.subr.mxu0 0.0
    %490 = vmatpush1.msra.mxu0 0.0
    %491 = vmatprep.subr.mxu0 0.0
    %492 = vmatpush1.msra.mxu0 0.0
    %493 = vmatprep.subr.mxu0 0.0
    %494 = vmatpush1.msra.mxu0 0.0
    %495 = vmatprep.subr.mxu0 0.0
    %496 = vmatpush1.msra.mxu0 0.0
    %497 = vmatprep.subr.mxu0 0.0
    %498 = vmatpush1.msra.mxu0 0.0
    %499 = vmatprep.subr.mxu0 0.0
    %500 = vmatpush1.msra.mxu0 0.0
    %501 = vmatprep.subr.mxu0 0.0
    %502 = vmatpush1.msra.mxu0 0.0
    %503 = vmatprep.subr.mxu0 0.0
    %504 = vmatpush1.msra.mxu0 0.0
    %505 = vmatprep.subr.mxu0 0.0
    %506 = vmatpush1.msra.mxu0 0.0
    %507 = vmatprep.subr.mxu0 0.0
    %508 = vmatpush1.msra.mxu0 0.0
    %509 = vmatprep.subr.mxu0 0.0
    %510 = vmatpush1.msra.mxu0 0.0
    %511 = vmatprep.subr.mxu0 0.0
    %512 = vmatpush1.msra.mxu0 0.0
    %513 = vmatprep.subr.mxu0 0.0
    %514 = vmatpush1.msra.mxu0 0.0
    %515 = vmatprep.subr.mxu0 0.0
    %516 = vmatpush1.msra.mxu0 0.0
    %517 = vmatprep.subr.mxu0 0.0
    %518 = vmatpush1.msra.mxu0 0.0
    %519 = vmatprep.subr.mxu0 0.0
    %520 = vmatpush1.msra.mxu0 0.0
    %521 = vmatprep.mubr.f32.mxu0 0.0
    %522 = vmatmul.mubr.f32.gmra.mrb[0].mxu0 %v431
    %v523 = vpop.f32.mrb[0].mxu0
    %v524 = vadd.f32 %v455, %v523
    %v525 = vpop.f32.mrb[0].mxu0
    %526 = vdwg.mxu0
    %v527 = vmul.f32 %v524, 0.2
    %v528 = vmax.f32 %v524, %v527
    %s529 = scalar_lea.vmem [#allocation7], 512
    %v530 = vld [vmem:[%s529] sm:$0xff]
    %v531 = vld [vmem:[%s529 + $0x8] sm:$0xff]
    %v532 = vld [vmem:[%s529 + $0x10] sm:$0xff]
    %v533 = vld [vmem:[%s529 + $0x18] sm:$0xff]
    %v534 = vld [vmem:[%s529 + $0x20] sm:$0xff]
    %v535 = vld [vmem:[%s529 + $0x28] sm:$0xff]
    %v536 = vld [vmem:[%s529 + $0x30] sm:$0xff]
    %v537 = vld [vmem:[%s529 + $0x38] sm:$0xff]
    %v538 = vld [vmem:[%s529 + $0x40] sm:$0xff]
    %v539 = vld [vmem:[%s529 + $0x48] sm:$0xff]
    %v540 = vld [vmem:[%s529 + $0x50] sm:$0xff]
    %v541 = vld [vmem:[%s529 + $0x58] sm:$0xff]
    %v542 = vld [vmem:[%s529 + $0x60] sm:$0xff]
    %v543 = vld [vmem:[%s529 + $0x68] sm:$0xff]
    %v544 = vld [vmem:[%s529 + $0x70] sm:$0xff]
    %v545 = vld [vmem:[%s529 + $0x78] sm:$0xff]
    %s546 = scalar_lea.vmem %s4, 4
    %v547 = vld [vmem:[%s546] sm:$0x1]
    %v549 = vlaneseq
    %v550 = vshrl.u32 %v549, 7
    %v551 = vsub.s32 0, %v550
    %v552 = vrot.slane %v547, %v551
    %554 = vmatprep.subr.mxu0 0.0
    %555 = vmatpush1.msra.mxu0 %v530
    %556 = vmatprep.subr.mxu0 0.0
    %557 = vmatpush1.msra.mxu0 %v531
    %558 = vmatprep.subr.mxu0 0.0
    %559 = vmatpush1.msra.mxu0 %v532
    %560 = vmatprep.subr.mxu0 0.0
    %561 = vmatpush1.msra.mxu0 %v533
    %562 = vmatprep.subr.mxu0 0.0
    %563 = vmatpush1.msra.mxu0 %v534
    %564 = vmatprep.subr.mxu0 0.0
    %565 = vmatpush1.msra.mxu0 %v535
    %566 = vmatprep.subr.mxu0 0.0
    %567 = vmatpush1.msra.mxu0 %v536
    %568 = vmatprep.subr.mxu0 0.0
    %569 = vmatpush1.msra.mxu0 %v537
    %570 = vmatprep.subr.mxu0 0.0
    %571 = vmatpush1.msra.mxu0 %v538
    %572 = vmatprep.subr.mxu0 0.0
    %573 = vmatpush1.msra.mxu0 %v539
    %574 = vmatprep.subr.mxu0 0.0
    %575 = vmatpush1.msra.mxu0 %v540
    %576 = vmatprep.subr.mxu0 0.0
    %577 = vmatpush1.msra.mxu0 %v541
    %578 = vmatprep.subr.mxu0 0.0
    %579 = vmatpush1.msra.mxu0 %v542
    %580 = vmatprep.subr.mxu0 0.0
    %581 = vmatpush1.msra.mxu0 %v543
    %582 = vmatprep.subr.mxu0 0.0
    %583 = vmatpush1.msra.mxu0 %v544
    %584 = vmatprep.subr.mxu0 0.0
    %585 = vmatpush1.msra.mxu0 %v545
    %586 = vmatprep.subr.mxu0 0.0
    %587 = vmatpush1.msra.mxu0 0.0
    %588 = vmatprep.subr.mxu0 0.0
    %589 = vmatpush1.msra.mxu0 0.0
    %590 = vmatprep.subr.mxu0 0.0
    %591 = vmatpush1.msra.mxu0 0.0
    %592 = vmatprep.subr.mxu0 0.0
    %593 = vmatpush1.msra.mxu0 0.0
    %594 = vmatprep.subr.mxu0 0.0
    %595 = vmatpush1.msra.mxu0 0.0
    %596 = vmatprep.subr.mxu0 0.0
    %597 = vmatpush1.msra.mxu0 0.0
    %598 = vmatprep.subr.mxu0 0.0
    %599 = vmatpush1.msra.mxu0 0.0
    %600 = vmatprep.subr.mxu0 0.0
    %601 = vmatpush1.msra.mxu0 0.0
    %602 = vmatprep.subr.mxu0 0.0
    %603 = vmatpush1.msra.mxu0 0.0
    %604 = vmatprep.subr.mxu0 0.0
    %605 = vmatpush1.msra.mxu0 0.0
    %606 = vmatprep.subr.mxu0 0.0
    %607 = vmatpush1.msra.mxu0 0.0
    %608 = vmatprep.subr.mxu0 0.0
    %609 = vmatpush1.msra.mxu0 0.0
    %610 = vmatprep.subr.mxu0 0.0
    %611 = vmatpush1.msra.mxu0 0.0
    %612 = vmatprep.subr.mxu0 0.0
    %613 = vmatpush1.msra.mxu0 0.0
    %614 = vmatprep.subr.mxu0 0.0
    %615 = vmatpush1.msra.mxu0 0.0
    %616 = vmatprep.subr.mxu0 0.0
    %617 = vmatpush1.msra.mxu0 0.0
    %618 = vmatprep.mubr.f32.mxu0 0.0
    %619 = vmatmul.mubr.f32.gmra.mrb[0].mxu0 %v528
    %v620 = vpop.f32.mrb[0].mxu0
    %v621 = vadd.f32 %v552, %v620
    %v622 = vpop.f32.mrb[0].mxu0
    %623 = vdwg.mxu0
    %v624 = vmul.f32 %v621, 0.2
    %v625 = vmax.f32 %v621, %v624
    %s626 = scalar_lea.vmem [#allocation7], 640
    %v627 = vld [vmem:[%s626] sm:$0xff]
    %v628 = vld [vmem:[%s626 + $0x8] sm:$0xff]
    %v629 = vld [vmem:[%s626 + $0x10] sm:$0xff]
    %v630 = vld [vmem:[%s626 + $0x18] sm:$0xff]
    %v631 = vld [vmem:[%s626 + $0x20] sm:$0xff]
    %v632 = vld [vmem:[%s626 + $0x28] sm:$0xff]
    %v633 = vld [vmem:[%s626 + $0x30] sm:$0xff]
    %v634 = vld [vmem:[%s626 + $0x38] sm:$0xff]
    %v635 = vld [vmem:[%s626 + $0x40] sm:$0xff]
    %v636 = vld [vmem:[%s626 + $0x48] sm:$0xff]
    %v637 = vld [vmem:[%s626 + $0x50] sm:$0xff]
    %v638 = vld [vmem:[%s626 + $0x58] sm:$0xff]
    %v639 = vld [vmem:[%s626 + $0x60] sm:$0xff]
    %v640 = vld [vmem:[%s626 + $0x68] sm:$0xff]
    %v641 = vld [vmem:[%s626 + $0x70] sm:$0xff]
    %v642 = vld [vmem:[%s626 + $0x78] sm:$0xff]
    %s643 = scalar_lea.vmem %s4, 5
    %v644 = vld [vmem:[%s643] sm:$0x1]
    %v646 = vlaneseq
    %v647 = vshrl.u32 %v646, 7
    %v648 = vsub.s32 0, %v647
    %v649 = vrot.slane %v644, %v648
    %651 = vmatprep.subr.mxu0 0.0
    %652 = vmatpush1.msra.mxu0 %v627
    %653 = vmatprep.subr.mxu0 0.0
    %654 = vmatpush1.msra.mxu0 %v628
    %655 = vmatprep.subr.mxu0 0.0
    %656 = vmatpush1.msra.mxu0 %v629
    %657 = vmatprep.subr.mxu0 0.0
    %658 = vmatpush1.msra.mxu0 %v630
    %659 = vmatprep.subr.mxu0 0.0
    %660 = vmatpush1.msra.mxu0 %v631
    %661 = vmatprep.subr.mxu0 0.0
    %662 = vmatpush1.msra.mxu0 %v632
    %663 = vmatprep.subr.mxu0 0.0
    %664 = vmatpush1.msra.mxu0 %v633
    %665 = vmatprep.subr.mxu0 0.0
    %666 = vmatpush1.msra.mxu0 %v634
    %667 = vmatprep.subr.mxu0 0.0
    %668 = vmatpush1.msra.mxu0 %v635
    %669 = vmatprep.subr.mxu0 0.0
    %670 = vmatpush1.msra.mxu0 %v636
    %671 = vmatprep.subr.mxu0 0.0
    %672 = vmatpush1.msra.mxu0 %v637
    %673 = vmatprep.subr.mxu0 0.0
    %674 = vmatpush1.msra.mxu0 %v638
    %675 = vmatprep.subr.mxu0 0.0
    %676 = vmatpush1.msra.mxu0 %v639
    %677 = vmatprep.subr.mxu0 0.0
    %678 = vmatpush1.msra.mxu0 %v640
    %679 = vmatprep.subr.mxu0 0.0
    %680 = vmatpush1.msra.mxu0 %v641
    %681 = vmatprep.subr.mxu0 0.0
    %682 = vmatpush1.msra.mxu0 %v642
    %683 = vmatprep.subr.mxu0 0.0
    %684 = vmatpush1.msra.mxu0 0.0
    %685 = vmatprep.subr.mxu0 0.0
    %686 = vmatpush1.msra.mxu0 0.0
    %687 = vmatprep.subr.mxu0 0.0
    %688 = vmatpush1.msra.mxu0 0.0
    %689 = vmatprep.subr.mxu0 0.0
    %690 = vmatpush1.msra.mxu0 0.0
    %691 = vmatprep.subr.mxu0 0.0
    %692 = vmatpush1.msra.mxu0 0.0
    %693 = vmatprep.subr.mxu0 0.0
    %694 = vmatpush1.msra.mxu0 0.0
    %695 = vmatprep.subr.mxu0 0.0
    %696 = vmatpush1.msra.mxu0 0.0
    %697 = vmatprep.subr.mxu0 0.0
    %698 = vmatpush1.msra.mxu0 0.0
    %699 = vmatprep.subr.mxu0 0.0
    %700 = vmatpush1.msra.mxu0 0.0
    %701 = vmatprep.subr.mxu0 0.0
    %702 = vmatpush1.msra.mxu0 0.0
    %703 = vmatprep.subr.mxu0 0.0
    %704 = vmatpush1.msra.mxu0 0.0
    %705 = vmatprep.subr.mxu0 0.0
    %706 = vmatpush1.msra.mxu0 0.0
    %707 = vmatprep.subr.mxu0 0.0
    %708 = vmatpush1.msra.mxu0 0.0
    %709 = vmatprep.subr.mxu0 0.0
    %710 = vmatpush1.msra.mxu0 0.0
    %711 = vmatprep.subr.mxu0 0.0
    %712 = vmatpush1.msra.mxu0 0.0
    %713 = vmatprep.subr.mxu0 0.0
    %714 = vmatpush1.msra.mxu0 0.0
    %715 = vmatprep.mubr.f32.mxu0 0.0
    %716 = vmatmul.mubr.f32.gmra.mrb[0].mxu0 %v625
    %v717 = vpop.f32.mrb[0].mxu0
    %v718 = vadd.f32 %v649, %v717
    %v719 = vpop.f32.mrb[0].mxu0
    %720 = vdwg.mxu0
    %v721 = vmul.f32 %v718, 0.2
    %v722 = vmax.f32 %v718, %v721
    %v723 = vadd.f32 %v431, %v722
    %v724 = vmul.f32 %v723, 0.70710677
    %725 = vst [vmem:[#allocation8] sm:$0xff] %v724
    // Predicated region
    $region34: #{tpu_custom_call.1} parent=1 // pred_check
      _
    $region35: #{tpu_custom_call.1} parent=1 // pred_check_branch
      %727 = sbr.rel (0) target = $region37
    $region36: #{tpu_custom_call.1} parent=1 // pred_region
      %s729 = ssub.s32 128, 128
      %730 = vsyncadd [#allocation4], %s729
      %s732 = sshll.u32 [#allocation8], 4
      %s733 = int_to_ptr.vmem [resolvable:$true] %s732
      %735 = dma.vmem_to_hbm [thread:$0]  %s733, 128, %s5, [#allocation4]
    $region37: #{tpu_custom_call.1} parent=1 // pred_fallthru
      _
    // Predicated region
    $region38: #{tpu_custom_call.1} parent=1 // pred_check
      _
    $region39: #{tpu_custom_call.1} parent=1 // pred_check_branch
      %737 = sbr.rel (0) target = $region41
    $region40: #{tpu_custom_call.1} parent=1 // pred_region
      %738 = dma.done [#allocation4], 128
    $region41: #{tpu_custom_call.1} parent=1 // pred_fallthru
      _
    %739 = vsyncpa [#allocation3], 1
    %740 = vsyncpa [#allocation6], 1
    %741 = vsyncpa [#allocation4], 1

</llo_original>
